<compile_context>
chip_gen: v6e
topology: v6e:2x2x1
jax: 0.10.0
libtpu: 0.0.40
codegen_flags: <defaults>
</compile_context>

<pallas_src>
import jax
import jax.numpy as jnp
from jax.experimental import pallas as pl
from jax.experimental.pallas import tpu as pltpu

# ---------------------------------------------------------------------------
# model hyper-params (same structure as FeatCAEUNET(in_channels, latent_dim))
# ---------------------------------------------------------------------------
IN_CHANNELS = 32                         # in_channels
LATENT = 8                               # latent_dim
L2 = 2 * LATENT                          # 16
MID = (IN_CHANNELS + 2 * LATENT) // 2    # 24
BN_EPS = 1e-5
LEAKY_SLOPE = 0.2
MXU_DTYPE = jnp.bfloat16                 # matmul-operand dtype (f32 accumulation)
                                         # set to jnp.float32 for exact f32 math

# ---------------------------------------------------------------------------
# packed-parameter layout (static, shared by wrapper and kernel)
# ---------------------------------------------------------------------------
# weights stored (out, in); packed along rows, columns zero-padded to IN_CHANNELS
W_SHAPES = {"wd3": (MID, IN_CHANNELS), "wd2": (L2, MID), "win": (L2, L2),
            "wu2a": (MID, L2), "wu2b": (MID, L2),
            "wu3a": (IN_CHANNELS, MID), "wu3b": (IN_CHANNELS, MID)}
# per-channel vectors (bias / BN gamma / BN beta), packed along rows, width 1
V_SHAPES = {"bd3": MID, "g2d": L2, "be2d": L2, "g1u": L2, "be1u": L2,
            "g2u": MID, "be2u": MID, "bu3": IN_CHANNELS}


def _row_layout(row_counts, align):
    offs, off = {}, 0
    for name, rows in row_counts.items():
        offs[name] = off
        off += -(-rows // align) * align
    return offs, off


W_OFF, W_ROWS = _row_layout({k: v[0] for k, v in W_SHAPES.items()}, 16)  # bf16-aligned
V_OFF, V_ROWS = _row_layout(V_SHAPES, 8)
W_COLS = IN_CHANNELS


# ---------------------------------------------------------------------------
# in-kernel helpers (activations are (C, M); weights (out, in), already MXU_DTYPE)
# ---------------------------------------------------------------------------
def _w(w_ref, name):
    r, c = W_SHAPES[name]
    off = W_OFF[name]
    return w_ref[off:off + r, 0:c]                       # static slice, MXU_DTYPE


def _v(v_ref, name):
    r = V_SHAPES[name]
    off = V_OFF[name]
    return v_ref[off:off + r, :]                         # (c, 1) f32


def _mm(w_pre, x):
    return jnp.dot(w_pre, x.astype(MXU_DTYPE), preferred_element_type=jnp.float32)


def _batchnorm(x, g, b):
    # PyTorch BatchNorm2d train mode: biased stats over (N, H, W) = lane axis.
    # Single-pass E[x], E[x^2] in f32 (max guard for cancellation), then a
    # precomputed per-channel affine so the per-element apply is 2 VPU ops.
    inv_m = 1.0 / x.shape[-1]
    mean = jnp.sum(x, axis=-1, keepdims=True) * inv_m
    ex2 = jnp.sum(x * x, axis=-1, keepdims=True) * inv_m
    var = jnp.maximum(ex2 - mean * mean, 0.0)
    s = jax.lax.rsqrt(var + BN_EPS) * g                  # (c, 1)
    t = b - mean * s                                     # (c, 1)
    return x * s + t


def _leaky_relu(x):
    return jnp.where(x > 0, x, LEAKY_SLOPE * x)


def _relu(x):
    return jnp.maximum(x, 0.0)


# ---------------------------------------------------------------------------
# the kernel: full FeatCAEUNET forward
#   x_hbm : (N, C, HW) f32 in HBM (memory_space=pl.ANY)
#   w_ref : packed weights  (W_ROWS, W_COLS) MXU_DTYPE, VMEM
#   v_ref : packed per-channel vectors (V_ROWS, 1) f32, VMEM
#   out_ref: (N, C, HW) f32, VMEM (auto copied back to HBM)
#   x_vmem: (C, N*HW) f32 scratch, in_sem: DMA semaphores (N,)
# ---------------------------------------------------------------------------
def feat_cae_unet_kernel(x_hbm, w_ref, v_ref, out_ref, x_vmem, in_sem):
    n, c, hw = x_hbm.shape

    # ---- fold the NCHW -> (C, M) layout change into the input DMA ----------
    copies = [pltpu.make_async_copy(x_hbm.at[i],
                                    x_vmem.at[:, pl.ds(i * hw, hw)],
                                    in_sem.at[i])
              for i in range(n)]
    for cp in copies:
        cp.start()
    for cp in copies:
        cp.wait()

    x = x_vmem[...]                                           # (C, M) f32

    def w(name): return _w(w_ref, name)
    def v(name): return _v(v_ref, name)

    # ---- outermost block: down (plain conv, bias kept: no BN follows) ------
    h1 = _mm(w("wd3"), x) + v("bd3")                          # (MID, M)

    # ---- middle block down: LeakyReLU -> conv -> BN (bias dropped: BN-exact)
    h4 = _batchnorm(_mm(w("wd2"), _leaky_relu(h1)), v("g2d"), v("be2d"))   # (2L, M)

    # ---- innermost block: down+up convs fused into one matmul, then BN -----
    h8 = _batchnorm(_mm(w("win"), _leaky_relu(h4)), v("g1u"), v("be1u"))   # (2L, M)

    # ---- middle block up: ReLU(cat[h4, h8]) @ Wu2 as split-weight matmuls --
    h10 = _mm(w("wu2a"), _relu(h4)) + _mm(w("wu2b"), _relu(h8))            # bias dropped
    h11 = _batchnorm(h10, v("g2u"), v("be2u"))                             # (MID, M)

    # ---- outermost block up: ReLU(cat[h1, h11]) @ Wu3, split-weight --------
    out = _mm(w("wu3a"), _relu(h1)) + _mm(w("wu3b"), _relu(h11)) + v("bu3")

    # ---- store per-batch slabs back in (N, C, HW) layout (lane-dense) ------
    for i in range(n):
        out_ref[i] = out[:, i * hw:(i + 1) * hw].astype(out_ref.dtype)


# ---------------------------------------------------------------------------
# parameter construction (deterministic; weights (out, in), biases/BN (C, 1))
# ---------------------------------------------------------------------------
def init_params(key):
    def nxt():
        nonlocal key
        key, sub = jax.random.split(key)
        return sub

    def conv(cout, cin):
        w = 0.05 * jax.random.normal(nxt(), (cout, cin), jnp.float32)
        b = 0.05 * jax.random.normal(nxt(), (cout, 1), jnp.float32)
        return w, b

    def bn(c):
        g = 1.0 + 0.05 * jax.random.normal(nxt(), (c, 1), jnp.float32)
        b = 0.05 * jax.random.normal(nxt(), (c, 1), jnp.float32)
        return g, b

    p = {}
    p["wd3"], p["bd3"] = conv(MID, IN_CHANNELS)            # Conv2d(C -> MID)
    p["wd2"], p["bd2"] = conv(L2, MID)                     # Conv2d(MID -> 2L)
    p["g2d"], p["be2d"] = bn(L2)
    p["wd1"], p["bd1"] = conv(LATENT, L2)                  # Conv2d(2L -> L)
    p["wu1"], p["bu1"] = conv(L2, LATENT)                  # ConvT(L -> 2L)
    p["g1u"], p["be1u"] = bn(L2)
    p["wu2"], p["bu2"] = conv(MID, 2 * L2)                 # ConvT(4L -> MID)
    p["g2u"], p["be2u"] = bn(MID)
    p["wu3"], p["bu3"] = conv(IN_CHANNELS, 2 * MID)        # ConvT(2*MID -> C)
    return p


def prepare_kernel_args(p):
    """One-time algebraic pre-processing + parameter packing (f32, outside kernel)."""
    # (1) fuse the innermost down/up convs (no nonlinearity between them); the
    #     fused bias (wu1@bd1 + bu1) is per-channel and feeds a train-mode BN,
    #     so it cancels exactly and is not materialized.
    w_inner = p["wu1"] @ p["wd1"]                          # (2L, 2L)
    # (2) split post-concat conv weights so skip concats become two matmuls.
    wu2a, wu2b = p["wu2"][:, :L2], p["wu2"][:, L2:]
    wu3a, wu3b = p["wu3"][:, :MID], p["wu3"][:, MID:]
    w_named = {"wd3": p["wd3"], "wd2": p["wd2"], "win": w_inner,
               "wu2a": wu2a, "wu2b": wu2b, "wu3a": wu3a, "wu3b": wu3b}
    # (3) biases feeding a BN (bd2, inner bias, bu2) are dropped (shift-invariance).
    v_named = {"bd3": p["bd3"], "g2d": p["g2d"], "be2d": p["be2d"],
               "g1u": p["g1u"], "be1u": p["be1u"],
               "g2u": p["g2u"], "be2u": p["be2u"], "bu3": p["bu3"]}

    w_pack = jnp.zeros((W_ROWS, W_COLS), MXU_DTYPE)        # pre-cast to MXU dtype
    for name, (rows, cols) in W_SHAPES.items():
        off = W_OFF[name]
        w_pack = w_pack.at[off:off + rows, :cols].set(w_named[name].astype(MXU_DTYPE))

    v_pack = jnp.zeros((V_ROWS, 1), jnp.float32)
    for name, rows in V_SHAPES.items():
        off = V_OFF[name]
        v_pack = v_pack.at[off:off + rows, :].set(v_named[name])
    return w_pack, v_pack


# ---------------------------------------------------------------------------
# cost estimate + generation-aware VMEM budget
# ---------------------------------------------------------------------------
_MATMUL_OI = [W_SHAPES[k] for k in W_SHAPES]


def _cost_estimate(m):
    wsum = sum(o * i for o, i in _MATMUL_OI)
    flops = 2 * m * wsum + 10 * m * (2 * MID + 2 * L2 + IN_CHANNELS)
    transcendentals = 2 * L2 + MID                         # rsqrt per BN channel
    bytes_accessed = 4 * m * 2 * IN_CHANNELS + 2 * W_ROWS * W_COLS + 4 * V_ROWS
    return pl.CostEstimate(flops=flops, transcendentals=transcendentals,
                           bytes_accessed=bytes_accessed)


def _vmem_limit_bytes():
    # ~7/8 of physical VMEM, capped at 100 MiB:
    #   v7x (64 MiB part)  -> 56 MiB;  v5e/v6e (128 MiB parts) -> 100 MiB.
    try:
        cap = pltpu.get_tpu_info().vmem_capacity_bytes
    except Exception:
        cap = 64 * 1024 * 1024
    return int(min(cap * 7 // 8, 100 * 1024 * 1024))


# ---------------------------------------------------------------------------
# wrapper: (N, C, H, W) in/out; only free reshapes outside the kernel
# ---------------------------------------------------------------------------
def feat_cae_unet_forward(x_nchw, params):
    n, c, h, w = x_nchw.shape
    hw = h * w
    m = n * hw
    x_flat = x_nchw.reshape(n, c, hw).astype(jnp.float32)  # contiguous reshape only
    w_pack, v_pack = prepare_kernel_args(params)

    out_flat = pl.pallas_call(
        feat_cae_unet_kernel,
        out_shape=jax.ShapeDtypeStruct((n, c, hw), jnp.float32),
        in_specs=[pl.BlockSpec(memory_space=pl.ANY),                       # x (HBM)
                  pl.BlockSpec(memory_space=pltpu.MemorySpace.VMEM),       # w_pack
                  pl.BlockSpec(memory_space=pltpu.MemorySpace.VMEM)],      # v_pack
        out_specs=pl.BlockSpec(memory_space=pltpu.MemorySpace.VMEM),
        scratch_shapes=[pltpu.VMEM((c, m), jnp.float32),                   # (C, M) slab
                        pltpu.SemaphoreType.DMA((n,))],
        cost_estimate=_cost_estimate(m),
        compiler_params=pltpu.CompilerParams(vmem_limit_bytes=_vmem_limit_bytes()),
    )(x_flat, w_pack, v_pack)

    return out_flat.reshape(n, c, h, w)


# ---------------------------------------------------------------------------
# module-faithful reference (unfused convs, all biases, explicit concats,
# two-pass BN), evaluated at the same MXU operand precision as the kernel.
# ---------------------------------------------------------------------------
def reference_forward(x_nchw, p):
    n, c, h, w = x_nchw.shape
    x = jnp.transpose(x_nchw.reshape(n, c, h * w), (1, 0, 2)).reshape(c, n * h * w)
    x = x.astype(jnp.float32)

    def dense(wk, bk, v):
        return (jnp.dot(p[wk].astype(MXU_DTYPE), v.astype(MXU_DTYPE),
                        preferred_element_type=jnp.float32) + p[bk])

    def bn(v, gk, bk):
        mu = jnp.mean(v, axis=1, keepdims=True)
        var = jnp.mean((v - mu) ** 2, axis=1, keepdims=True)
        return (v - mu) * jax.lax.rsqrt(var + BN_EPS) * p[gk] + p[bk]

    lrelu = lambda v: jnp.where(v > 0, v, LEAKY_SLOPE * v)
    relu = lambda v: jnp.maximum(v, 0.0)

    h1 = dense("wd3", "bd3", x)
    h4 = bn(dense("wd2", "bd2", lrelu(h1)), "g2d", "be2d")
    h6 = dense("wd1", "bd1", lrelu(h4))
    h8 = bn(dense("wu1", "bu1", h6), "g1u", "be1u")
    y1 = jnp.concatenate([h4, h8], axis=0)                 # torch.cat([x, model(x)], 1)
    h11 = bn(dense("wu2", "bu2", relu(y1)), "g2u", "be2u")
    y2 = jnp.concatenate([h1, h11], axis=0)
    out = dense("wu3", "bu3", relu(y2))
    return jnp.transpose(out.reshape(c, n, h * w), (1, 0, 2)).reshape(n, c, h, w)


# ---------------------------------------------------------------------------
if __name__ == "__main__":
    key = jax.random.PRNGKey(0)
    k_x, k_p = jax.random.split(key)

    batch, hgt, wid = 2, 16, 16               # HW = 256 (lane-dense), M = 512 pixels
    x = jax.random.normal(k_x, (batch, IN_CHANNELS, hgt, wid), jnp.float32)  # NCHW
    params = init_params(k_p)

    out = jax.block_until_ready(feat_cae_unet_forward(x, params))
    ref = reference_forward(x, params)

    assert out.shape == (batch, IN_CHANNELS, hgt, wid)
    # Kernel uses fused/split weights, dropped pre-BN biases (exact), and
    # single-pass BN; the reference is the unfused module form at matching MXU
    # precision -> residual differences are bf16 rounding only.
    err = float(jnp.max(jnp.abs(out - ref)))
    assert err < 3e-2, err

    print("KERNEL_OK")
</pallas_src>

<mosaic_0001>
module attributes {stable_mosaic.version = 11 : i64} {
  func.func @feat_cae_unet_kernel(%arg0: memref<2x32x256xf32, #tpu.memory_space<any>>, %arg1: memref<192x32xbf16, #tpu.memory_space<vmem>>, %arg2: memref<168x1xf32, #tpu.memory_space<vmem>>, %arg3: memref<2x32x256xf32, #tpu.memory_space<vmem>>, %arg4: memref<32x512xf32, #tpu.memory_space<vmem>>, %arg5: memref<2x!tpu.dma_semaphore, #tpu.memory_space<semaphore_mem>>) attributes {dimension_semantics = [], scalar_prefetch = 0 : i64, scratch_operands = 2 : i64, tpu.core_type = #tpu.core_type<tc>} {
    %c0_i32 = arith.constant 0 : i32
    %c0_i32_0 = arith.constant 0 : i32
    %c0_i32_1 = arith.constant 0 : i32
    %c0_i32_2 = arith.constant 0 : i32
    %0 = tpu.memref_slice %arg0[%c0_i32, %c0_i32_1, %c0_i32_2] : memref<2x32x256xf32, #tpu.memory_space<any>> -> memref<1x32x256xf32, #tpu.memory_space<any>>
    %1 = tpu.memref_squeeze %0 : memref<1x32x256xf32, #tpu.memory_space<any>> -> memref<32x256xf32, #tpu.memory_space<any>>
    %c0_i32_3 = arith.constant 0 : i32
    %c0_i32_4 = arith.constant 0 : i32
    %2 = tpu.memref_slice %arg4[%c0_i32_3, %c0_i32_4] : memref<32x512xf32, #tpu.memory_space<vmem>> -> memref<32x256xf32, #tpu.memory_space<vmem>>
    %3 = tpu.memref_slice %arg5[%c0_i32_0] : memref<2x!tpu.dma_semaphore, #tpu.memory_space<semaphore_mem>> -> memref<1x!tpu.dma_semaphore, #tpu.memory_space<semaphore_mem>>
    %4 = tpu.memref_squeeze %3 : memref<1x!tpu.dma_semaphore, #tpu.memory_space<semaphore_mem>> -> memref<!tpu.dma_semaphore, #tpu.memory_space<semaphore_mem>>
    tpu.enqueue_dma source(%1 : memref<32x256xf32, #tpu.memory_space<any>>) target(%2 : memref<32x256xf32, #tpu.memory_space<vmem>>) target_semaphore(%4 : memref<!tpu.dma_semaphore, #tpu.memory_space<semaphore_mem>>)
    %c1_i32 = arith.constant 1 : i32
    %c1_i32_5 = arith.constant 1 : i32
    %c0_i32_6 = arith.constant 0 : i32
    %c0_i32_7 = arith.constant 0 : i32
    %5 = tpu.memref_slice %arg0[%c1_i32, %c0_i32_6, %c0_i32_7] : memref<2x32x256xf32, #tpu.memory_space<any>> -> memref<1x32x256xf32, #tpu.memory_space<any>>
    %6 = tpu.memref_squeeze %5 : memref<1x32x256xf32, #tpu.memory_space<any>> -> memref<32x256xf32, #tpu.memory_space<any>>
    %c0_i32_8 = arith.constant 0 : i32
    %c256_i32 = arith.constant 256 : i32
    %7 = tpu.memref_slice %arg4[%c0_i32_8, %c256_i32] : memref<32x512xf32, #tpu.memory_space<vmem>> -> memref<32x256xf32, #tpu.memory_space<vmem>>
    %8 = tpu.memref_slice %arg5[%c1_i32_5] : memref<2x!tpu.dma_semaphore, #tpu.memory_space<semaphore_mem>> -> memref<1x!tpu.dma_semaphore, #tpu.memory_space<semaphore_mem>>
    %9 = tpu.memref_squeeze %8 : memref<1x!tpu.dma_semaphore, #tpu.memory_space<semaphore_mem>> -> memref<!tpu.dma_semaphore, #tpu.memory_space<semaphore_mem>>
    tpu.enqueue_dma source(%6 : memref<32x256xf32, #tpu.memory_space<any>>) target(%7 : memref<32x256xf32, #tpu.memory_space<vmem>>) target_semaphore(%9 : memref<!tpu.dma_semaphore, #tpu.memory_space<semaphore_mem>>)
    %c0_i32_9 = arith.constant 0 : i32
    %c0_i32_10 = arith.constant 0 : i32
    %c0_i32_11 = arith.constant 0 : i32
    %c0_i32_12 = arith.constant 0 : i32
    %10 = tpu.memref_slice %arg0[%c0_i32_9, %c0_i32_11, %c0_i32_12] : memref<2x32x256xf32, #tpu.memory_space<any>> -> memref<1x32x256xf32, #tpu.memory_space<any>>
    %11 = tpu.memref_squeeze %10 : memref<1x32x256xf32, #tpu.memory_space<any>> -> memref<32x256xf32, #tpu.memory_space<any>>
    %c0_i32_13 = arith.constant 0 : i32
    %c0_i32_14 = arith.constant 0 : i32
    %12 = tpu.memref_slice %arg4[%c0_i32_13, %c0_i32_14] : memref<32x512xf32, #tpu.memory_space<vmem>> -> memref<32x256xf32, #tpu.memory_space<vmem>>
    %13 = tpu.memref_slice %arg5[%c0_i32_10] : memref<2x!tpu.dma_semaphore, #tpu.memory_space<semaphore_mem>> -> memref<1x!tpu.dma_semaphore, #tpu.memory_space<semaphore_mem>>
    %14 = tpu.memref_squeeze %13 : memref<1x!tpu.dma_semaphore, #tpu.memory_space<semaphore_mem>> -> memref<!tpu.dma_semaphore, #tpu.memory_space<semaphore_mem>>
    tpu.wait_dma2 semaphore(%14 : memref<!tpu.dma_semaphore, #tpu.memory_space<semaphore_mem>>) src(%11 : memref<32x256xf32, #tpu.memory_space<any>>) dst(%12 : memref<32x256xf32, #tpu.memory_space<vmem>>)
    %c1_i32_15 = arith.constant 1 : i32
    %c1_i32_16 = arith.constant 1 : i32
    %c0_i32_17 = arith.constant 0 : i32
    %c0_i32_18 = arith.constant 0 : i32
    %15 = tpu.memref_slice %arg0[%c1_i32_15, %c0_i32_17, %c0_i32_18] : memref<2x32x256xf32, #tpu.memory_space<any>> -> memref<1x32x256xf32, #tpu.memory_space<any>>
    %16 = tpu.memref_squeeze %15 : memref<1x32x256xf32, #tpu.memory_space<any>> -> memref<32x256xf32, #tpu.memory_space<any>>
    %c0_i32_19 = arith.constant 0 : i32
    %c256_i32_20 = arith.constant 256 : i32
    %17 = tpu.memref_slice %arg4[%c0_i32_19, %c256_i32_20] : memref<32x512xf32, #tpu.memory_space<vmem>> -> memref<32x256xf32, #tpu.memory_space<vmem>>
    %18 = tpu.memref_slice %arg5[%c1_i32_16] : memref<2x!tpu.dma_semaphore, #tpu.memory_space<semaphore_mem>> -> memref<1x!tpu.dma_semaphore, #tpu.memory_space<semaphore_mem>>
    %19 = tpu.memref_squeeze %18 : memref<1x!tpu.dma_semaphore, #tpu.memory_space<semaphore_mem>> -> memref<!tpu.dma_semaphore, #tpu.memory_space<semaphore_mem>>
    tpu.wait_dma2 semaphore(%19 : memref<!tpu.dma_semaphore, #tpu.memory_space<semaphore_mem>>) src(%16 : memref<32x256xf32, #tpu.memory_space<any>>) dst(%17 : memref<32x256xf32, #tpu.memory_space<vmem>>)
    %c0 = arith.constant 0 : index
    %c0_21 = arith.constant 0 : index
    %20 = vector.load %arg4[%c0, %c0_21] : memref<32x512xf32, #tpu.memory_space<vmem>>, vector<32x512xf32>
    %c0_22 = arith.constant 0 : index
    %c0_23 = arith.constant 0 : index
    %21 = vector.load %arg1[%c0_22, %c0_23] : memref<192x32xbf16, #tpu.memory_space<vmem>>, vector<24x32xbf16>
    %22 = arith.truncf %20 : vector<32x512xf32> to vector<32x512xbf16>
    %cst = arith.constant dense<0.000000e+00> : vector<24x512xf32>
    %23 = tpu.matmul %21, %22, %cst {dimension_numbers = #tpu.dot_dimension_numbers<[1], [0], [0], [1], [0, 0, 1, 1], [], []>} : vector<24x32xbf16>, vector<32x512xbf16>, vector<24x512xf32> -> vector<24x512xf32>
    %c0_24 = arith.constant 0 : index
    %c0_25 = arith.constant 0 : index
    %24 = vector.load %arg2[%c0_24, %c0_25] : memref<168x1xf32, #tpu.memory_space<vmem>>, vector<24x1xf32>
    %25 = vector.broadcast %24 : vector<24x1xf32> to vector<24x512xf32>
    %26 = arith.addf %23, %25 : vector<24x512xf32>
    %c32 = arith.constant 32 : index
    %c0_26 = arith.constant 0 : index
    %27 = vector.load %arg1[%c32, %c0_26] : memref<192x32xbf16, #tpu.memory_space<vmem>>, vector<16x24xbf16>
    %cst_27 = arith.constant 0.000000e+00 : f32
    %28 = vector.broadcast %cst_27 : f32 to vector<24x512xf32>
    %29 = arith.cmpf ogt, %26, %28 : vector<24x512xf32>
    %cst_28 = arith.constant 2.000000e-01 : f32
    %30 = vector.broadcast %cst_28 : f32 to vector<24x512xf32>
    %31 = arith.mulf %30, %26 : vector<24x512xf32>
    %32 = arith.select %29, %26, %31 : vector<24x512xi1>, vector<24x512xf32>
    %33 = arith.truncf %32 : vector<24x512xf32> to vector<24x512xbf16>
    %cst_29 = arith.constant dense<0.000000e+00> : vector<16x512xf32>
    %34 = tpu.matmul %27, %33, %cst_29 {dimension_numbers = #tpu.dot_dimension_numbers<[1], [0], [0], [1], [0, 0, 1, 1], [], []>} : vector<16x24xbf16>, vector<24x512xbf16>, vector<16x512xf32> -> vector<16x512xf32>
    %c24 = arith.constant 24 : index
    %c0_30 = arith.constant 0 : index
    %35 = vector.load %arg2[%c24, %c0_30] : memref<168x1xf32, #tpu.memory_space<vmem>>, vector<16x1xf32>
    %c40 = arith.constant 40 : index
    %c0_31 = arith.constant 0 : index
    %36 = vector.load %arg2[%c40, %c0_31] : memref<168x1xf32, #tpu.memory_space<vmem>>, vector<16x1xf32>
    %cst_32 = arith.constant dense<0.000000e+00> : vector<16xf32>
    %37 = vector.multi_reduction <add>, %34, %cst_32 [1] : vector<16x512xf32> to vector<16xf32>
    %38 = vector.shape_cast %37 : vector<16xf32> to vector<16x1xf32>
    %cst_33 = arith.constant 0.001953125 : f32
    %39 = vector.broadcast %cst_33 : f32 to vector<16x1xf32>
    %40 = arith.mulf %38, %39 : vector<16x1xf32>
    %41 = arith.mulf %34, %34 : vector<16x512xf32>
    %cst_34 = arith.constant dense<0.000000e+00> : vector<16xf32>
    %42 = vector.multi_reduction <add>, %41, %cst_34 [1] : vector<16x512xf32> to vector<16xf32>
    %43 = vector.shape_cast %42 : vector<16xf32> to vector<16x1xf32>
    %cst_35 = arith.constant 0.001953125 : f32
    %44 = vector.broadcast %cst_35 : f32 to vector<16x1xf32>
    %45 = arith.mulf %43, %44 : vector<16x1xf32>
    %46 = arith.mulf %40, %40 : vector<16x1xf32>
    %47 = arith.subf %45, %46 : vector<16x1xf32>
    %cst_36 = arith.constant 0.000000e+00 : f32
    %48 = vector.broadcast %cst_36 : f32 to vector<16x1xf32>
    %49 = arith.maximumf %47, %48 : vector<16x1xf32>
    %cst_37 = arith.constant 9.99999974E-6 : f32
    %50 = vector.broadcast %cst_37 : f32 to vector<16x1xf32>
    %51 = arith.addf %49, %50 : vector<16x1xf32>
    %52 = math.rsqrt %51 : vector<16x1xf32>
    %53 = arith.mulf %52, %35 : vector<16x1xf32>
    %54 = arith.mulf %40, %53 : vector<16x1xf32>
    %55 = arith.subf %36, %54 : vector<16x1xf32>
    %56 = vector.broadcast %53 : vector<16x1xf32> to vector<16x512xf32>
    %57 = arith.mulf %34, %56 : vector<16x512xf32>
    %58 = vector.broadcast %55 : vector<16x1xf32> to vector<16x512xf32>
    %59 = arith.addf %57, %58 : vector<16x512xf32>
    %c48 = arith.constant 48 : index
    %c0_38 = arith.constant 0 : index
    %60 = vector.load %arg1[%c48, %c0_38] : memref<192x32xbf16, #tpu.memory_space<vmem>>, vector<16x16xbf16>
    %cst_39 = arith.constant 0.000000e+00 : f32
    %61 = vector.broadcast %cst_39 : f32 to vector<16x512xf32>
    %62 = arith.cmpf ogt, %59, %61 : vector<16x512xf32>
    %cst_40 = arith.constant 2.000000e-01 : f32
    %63 = vector.broadcast %cst_40 : f32 to vector<16x512xf32>
    %64 = arith.mulf %63, %59 : vector<16x512xf32>
    %65 = arith.select %62, %59, %64 : vector<16x512xi1>, vector<16x512xf32>
    %66 = arith.truncf %65 : vector<16x512xf32> to vector<16x512xbf16>
    %cst_41 = arith.constant dense<0.000000e+00> : vector<16x512xf32>
    %67 = tpu.matmul %60, %66, %cst_41 {dimension_numbers = #tpu.dot_dimension_numbers<[1], [0], [0], [1], [0, 0, 1, 1], [], []>} : vector<16x16xbf16>, vector<16x512xbf16>, vector<16x512xf32> -> vector<16x512xf32>
    %c56 = arith.constant 56 : index
    %c0_42 = arith.constant 0 : index
    %68 = vector.load %arg2[%c56, %c0_42] : memref<168x1xf32, #tpu.memory_space<vmem>>, vector<16x1xf32>
    %c72 = arith.constant 72 : index
    %c0_43 = arith.constant 0 : index
    %69 = vector.load %arg2[%c72, %c0_43] : memref<168x1xf32, #tpu.memory_space<vmem>>, vector<16x1xf32>
    %cst_44 = arith.constant dense<0.000000e+00> : vector<16xf32>
    %70 = vector.multi_reduction <add>, %67, %cst_44 [1] : vector<16x512xf32> to vector<16xf32>
    %71 = vector.shape_cast %70 : vector<16xf32> to vector<16x1xf32>
    %cst_45 = arith.constant 0.001953125 : f32
    %72 = vector.broadcast %cst_45 : f32 to vector<16x1xf32>
    %73 = arith.mulf %71, %72 : vector<16x1xf32>
    %74 = arith.mulf %67, %67 : vector<16x512xf32>
    %cst_46 = arith.constant dense<0.000000e+00> : vector<16xf32>
    %75 = vector.multi_reduction <add>, %74, %cst_46 [1] : vector<16x512xf32> to vector<16xf32>
    %76 = vector.shape_cast %75 : vector<16xf32> to vector<16x1xf32>
    %cst_47 = arith.constant 0.001953125 : f32
    %77 = vector.broadcast %cst_47 : f32 to vector<16x1xf32>
    %78 = arith.mulf %76, %77 : vector<16x1xf32>
    %79 = arith.mulf %73, %73 : vector<16x1xf32>
    %80 = arith.subf %78, %79 : vector<16x1xf32>
    %cst_48 = arith.constant 0.000000e+00 : f32
    %81 = vector.broadcast %cst_48 : f32 to vector<16x1xf32>
    %82 = arith.maximumf %80, %81 : vector<16x1xf32>
    %cst_49 = arith.constant 9.99999974E-6 : f32
    %83 = vector.broadcast %cst_49 : f32 to vector<16x1xf32>
    %84 = arith.addf %82, %83 : vector<16x1xf32>
    %85 = math.rsqrt %84 : vector<16x1xf32>
    %86 = arith.mulf %85, %68 : vector<16x1xf32>
    %87 = arith.mulf %73, %86 : vector<16x1xf32>
    %88 = arith.subf %69, %87 : vector<16x1xf32>
    %89 = vector.broadcast %86 : vector<16x1xf32> to vector<16x512xf32>
    %90 = arith.mulf %67, %89 : vector<16x512xf32>
    %91 = vector.broadcast %88 : vector<16x1xf32> to vector<16x512xf32>
    %92 = arith.addf %90, %91 : vector<16x512xf32>
    %c64 = arith.constant 64 : index
    %c0_50 = arith.constant 0 : index
    %93 = vector.load %arg1[%c64, %c0_50] : memref<192x32xbf16, #tpu.memory_space<vmem>>, vector<24x16xbf16>
    %cst_51 = arith.constant 0.000000e+00 : f32
    %94 = vector.broadcast %cst_51 : f32 to vector<16x512xf32>
    %95 = arith.maximumf %59, %94 : vector<16x512xf32>
    %96 = arith.truncf %95 : vector<16x512xf32> to vector<16x512xbf16>
    %cst_52 = arith.constant dense<0.000000e+00> : vector<24x512xf32>
    %97 = tpu.matmul %93, %96, %cst_52 {dimension_numbers = #tpu.dot_dimension_numbers<[1], [0], [0], [1], [0, 0, 1, 1], [], []>} : vector<24x16xbf16>, vector<16x512xbf16>, vector<24x512xf32> -> vector<24x512xf32>
    %c96 = arith.constant 96 : index
    %c0_53 = arith.constant 0 : index
    %98 = vector.load %arg1[%c96, %c0_53] : memref<192x32xbf16, #tpu.memory_space<vmem>>, vector<24x16xbf16>
    %cst_54 = arith.constant 0.000000e+00 : f32
    %99 = vector.broadcast %cst_54 : f32 to vector<16x512xf32>
    %100 = arith.maximumf %92, %99 : vector<16x512xf32>
    %101 = arith.truncf %100 : vector<16x512xf32> to vector<16x512xbf16>
    %cst_55 = arith.constant dense<0.000000e+00> : vector<24x512xf32>
    %102 = tpu.matmul %98, %101, %cst_55 {dimension_numbers = #tpu.dot_dimension_numbers<[1], [0], [0], [1], [0, 0, 1, 1], [], []>} : vector<24x16xbf16>, vector<16x512xbf16>, vector<24x512xf32> -> vector<24x512xf32>
    %103 = arith.addf %97, %102 : vector<24x512xf32>
    %c88 = arith.constant 88 : index
    %c0_56 = arith.constant 0 : index
    %104 = vector.load %arg2[%c88, %c0_56] : memref<168x1xf32, #tpu.memory_space<vmem>>, vector<24x1xf32>
    %c112 = arith.constant 112 : index
    %c0_57 = arith.constant 0 : index
    %105 = vector.load %arg2[%c112, %c0_57] : memref<168x1xf32, #tpu.memory_space<vmem>>, vector<24x1xf32>
    %cst_58 = arith.constant dense<0.000000e+00> : vector<24xf32>
    %106 = vector.multi_reduction <add>, %103, %cst_58 [1] : vector<24x512xf32> to vector<24xf32>
    %107 = vector.shape_cast %106 : vector<24xf32> to vector<24x1xf32>
    %cst_59 = arith.constant 0.001953125 : f32
    %108 = vector.broadcast %cst_59 : f32 to vector<24x1xf32>
    %109 = arith.mulf %107, %108 : vector<24x1xf32>
    %110 = arith.mulf %103, %103 : vector<24x512xf32>
    %cst_60 = arith.constant dense<0.000000e+00> : vector<24xf32>
    %111 = vector.multi_reduction <add>, %110, %cst_60 [1] : vector<24x512xf32> to vector<24xf32>
    %112 = vector.shape_cast %111 : vector<24xf32> to vector<24x1xf32>
    %cst_61 = arith.constant 0.001953125 : f32
    %113 = vector.broadcast %cst_61 : f32 to vector<24x1xf32>
    %114 = arith.mulf %112, %113 : vector<24x1xf32>
    %115 = arith.mulf %109, %109 : vector<24x1xf32>
    %116 = arith.subf %114, %115 : vector<24x1xf32>
    %cst_62 = arith.constant 0.000000e+00 : f32
    %117 = vector.broadcast %cst_62 : f32 to vector<24x1xf32>
    %118 = arith.maximumf %116, %117 : vector<24x1xf32>
    %cst_63 = arith.constant 9.99999974E-6 : f32
    %119 = vector.broadcast %cst_63 : f32 to vector<24x1xf32>
    %120 = arith.addf %118, %119 : vector<24x1xf32>
    %121 = math.rsqrt %120 : vector<24x1xf32>
    %122 = arith.mulf %121, %104 : vector<24x1xf32>
    %123 = arith.mulf %109, %122 : vector<24x1xf32>
    %124 = arith.subf %105, %123 : vector<24x1xf32>
    %125 = vector.broadcast %122 : vector<24x1xf32> to vector<24x512xf32>
    %126 = arith.mulf %103, %125 : vector<24x512xf32>
    %127 = vector.broadcast %124 : vector<24x1xf32> to vector<24x512xf32>
    %128 = arith.addf %126, %127 : vector<24x512xf32>
    %c128 = arith.constant 128 : index
    %c0_64 = arith.constant 0 : index
    %129 = vector.load %arg1[%c128, %c0_64] : memref<192x32xbf16, #tpu.memory_space<vmem>>, vector<32x24xbf16>
    %cst_65 = arith.constant 0.000000e+00 : f32
    %130 = vector.broadcast %cst_65 : f32 to vector<24x512xf32>
    %131 = arith.maximumf %26, %130 : vector<24x512xf32>
    %132 = arith.truncf %131 : vector<24x512xf32> to vector<24x512xbf16>
    %cst_66 = arith.constant dense<0.000000e+00> : vector<32x512xf32>
    %133 = tpu.matmul %129, %132, %cst_66 {dimension_numbers = #tpu.dot_dimension_numbers<[1], [0], [0], [1], [0, 0, 1, 1], [], []>} : vector<32x24xbf16>, vector<24x512xbf16>, vector<32x512xf32> -> vector<32x512xf32>
    %c160 = arith.constant 160 : index
    %c0_67 = arith.constant 0 : index
    %134 = vector.load %arg1[%c160, %c0_67] : memref<192x32xbf16, #tpu.memory_space<vmem>>, vector<32x24xbf16>
    %cst_68 = arith.constant 0.000000e+00 : f32
    %135 = vector.broadcast %cst_68 : f32 to vector<24x512xf32>
    %136 = arith.maximumf %128, %135 : vector<24x512xf32>
    %137 = arith.truncf %136 : vector<24x512xf32> to vector<24x512xbf16>
    %cst_69 = arith.constant dense<0.000000e+00> : vector<32x512xf32>
    %138 = tpu.matmul %134, %137, %cst_69 {dimension_numbers = #tpu.dot_dimension_numbers<[1], [0], [0], [1], [0, 0, 1, 1], [], []>} : vector<32x24xbf16>, vector<24x512xbf16>, vector<32x512xf32> -> vector<32x512xf32>
    %139 = arith.addf %133, %138 : vector<32x512xf32>
    %c136 = arith.constant 136 : index
    %c0_70 = arith.constant 0 : index
    %140 = vector.load %arg2[%c136, %c0_70] : memref<168x1xf32, #tpu.memory_space<vmem>>, vector<32x1xf32>
    %141 = vector.broadcast %140 : vector<32x1xf32> to vector<32x512xf32>
    %142 = arith.addf %139, %141 : vector<32x512xf32>
    %143 = vector.extract_strided_slice %142 {offsets = [0, 0], sizes = [32, 256], strides = [1, 1]} : vector<32x512xf32> to vector<32x256xf32>
    %c0_71 = arith.constant 0 : index
    %c0_72 = arith.constant 0 : index
    %c0_73 = arith.constant 0 : index
    %144 = vector.load %arg3[%c0_71, %c0_72, %c0_73] : memref<2x32x256xf32, #tpu.memory_space<vmem>>, vector<1x32x256xf32>
    %145 = vector.shape_cast %144 : vector<1x32x256xf32> to vector<32x256xf32>
    %146 = vector.shape_cast %143 : vector<32x256xf32> to vector<1x32x256xf32>
    tpu.vector_store %arg3[%c0_71, %c0_72, %c0_73], %146 {strides = array<i32>} : memref<2x32x256xf32, #tpu.memory_space<vmem>>, vector<1x32x256xf32>,
    %147 = vector.extract_strided_slice %142 {offsets = [0, 256], sizes = [32, 256], strides = [1, 1]} : vector<32x512xf32> to vector<32x256xf32>
    %c1 = arith.constant 1 : index
    %c0_74 = arith.constant 0 : index
    %c0_75 = arith.constant 0 : index
    %148 = vector.load %arg3[%c1, %c0_74, %c0_75] : memref<2x32x256xf32, #tpu.memory_space<vmem>>, vector<1x32x256xf32>
    %149 = vector.shape_cast %148 : vector<1x32x256xf32> to vector<32x256xf32>
    %150 = vector.shape_cast %147 : vector<32x256xf32> to vector<1x32x256xf32>
    tpu.vector_store %arg3[%c1, %c0_74, %c0_75], %150 {strides = array<i32>} : memref<2x32x256xf32, #tpu.memory_space<vmem>>, vector<1x32x256xf32>,
    return
  }
}

</mosaic_0001>

<llo_original>
// kernel: tpu_custom_call.1
$region0: #{tpu_custom_call.1}
  #allocation0 [shape = 'u32[]', space=smem, size = 0x4, offset = 0x4, fixed_abs, tag = 'smem constant byte address 0x4 - core index']
  #allocation1 [shape = 'u32[144,128]{1,0:T(1,128)}', space=vmem, size = 0x12000, scoped, tag = 'internal scratch']
  #allocation2 [shape = 'f32[32,512]{1,0:T(8,128)}', space=vmem, size = 0x10000, scoped, tag = 'scratch operand']
  #allocation3 [shape = 's32[2]{0}', space=sflag, size = 0x8, scoped, tag = 'scratch operand']
  #allocation6 [shape = 's32[]', space=sflag, size = 0x4, offset = 0, fixed_abs, tag = 'sflag constant byte address 0x0 - dummy sync flag']
  #allocation7 [shape = 's32[]', space=sflag, size = 0x4, offset = 0, fixed_abs, tag = 'sflag constant byte address 0x0 - dummy sync flag']
  %s0 = inlined_call_operand.vmem [shape: f32[2,32,256], index: 0, kind: input, shape index: {}]
  %s1 = inlined_call_operand.vmem [shape: bf16[192,32], index: 1, kind: input, shape index: {}]
  %s2 = inlined_call_operand.vmem [shape: f32[168,1], index: 2, kind: input, shape index: {}]
  %s3 = inlined_call_operand.hbm [shape: f32[2,32,256], index: 3, kind: output, shape index: {}]
  %s4 = sld [smem:[#allocation0]]
  $region86: #{tpu_custom_call.1} parent=0
    _
  %s6 = ssub.s32 1, %s4
  %s7 = scalar_select 0, %s6, %s4
  $region1: #{tpu_custom_call.1} parent=0
    #allocation4 [shape = 'u8[65536]{0}', space=vmem, size = 0x10000, scoped, tag = 'output window, operand 0, single buffered']
    #allocation5 [shape = 's32[1]{0}', space=sflag, size = 0x4, scoped, tag = 'scoped memory for tpu_custom_call.1']
    %8 = vsyncpa [#allocation5], 0
    // Predicated region
    $region2: #{tpu_custom_call.1} parent=1 // pred_check
      _
    $region3: #{tpu_custom_call.1} parent=1 // pred_check_branch
      %10 = sbr.rel (0) target = $region5
    $region4: #{tpu_custom_call.1} parent=1 // pred_region
      _
    $region5: #{tpu_custom_call.1} parent=1 // pred_fallthru
      _
    // Predicated region
    $region6: #{tpu_custom_call.1} parent=1 // pred_check
      _
    $region7: #{tpu_custom_call.1} parent=1 // pred_check_branch
      %12 = sbr.rel (0) target = $region9
    $region8: #{tpu_custom_call.1} parent=1 // pred_region
      _
    $region9: #{tpu_custom_call.1} parent=1 // pred_fallthru
      _
    %p15 = scmp.lt.u32.totalorder 16, 8
    %p16 = pneg %p15
    // Predicated region
    $region10: #{tpu_custom_call.1} parent=1 // pred_check
      _
    $region11: #{tpu_custom_call.1} parent=1 // pred_check_branch
      %18 = sbr.rel (%p15) target = $region13
    $region12: #{tpu_custom_call.1} parent=1 // pred_region
      %s40 = sand.u32 16, 7
      %p41 = scmp.eq.s32.totalorder %s40, 0
      // Predicated region
      $region25: #{tpu_custom_call.1} parent=12 // pred_check
        %p42 = pneg %p41
      $region26: #{tpu_custom_call.1} parent=12 // pred_check_branch
        %44 = sbr.rel (%p42) target = $region28
      $region27: #{tpu_custom_call.1} parent=12 // pred_region
        loop: start=0, step=1, limit=1
        $region29: #{tpu_custom_call.1} parent=27 // loop_pre_header
          _
        $region30: #{tpu_custom_call.1} parent=27 // loop_header
          %s46 = sphi 0, %s50
          %p47 = scmp.ge.s32.totalorder %s46, 1
          %s51 = sphi %s0, %s0
          %s52 = sphi [#allocation2], [#allocation2]
        $region31: #{tpu_custom_call.1} parent=27 // loop_header_branch
          %49 = sbr.rel (%p47) target = $region35
        $region32: #{tpu_custom_call.1} parent=27 // loop_body
          %v53 = vld [vmem:[%s51] sm:$0xff]
          %54 = vst [vmem:[%s52] sm:$0xff] %v53
          %v55 = vld [vmem:[%s51 + $0x8] sm:$0xff]
          %56 = vst [vmem:[%s52 + $0x8] sm:$0xff] %v55
          %v57 = vld [vmem:[%s51 + $0x10] sm:$0xff]
          %58 = vst [vmem:[%s52 + $0x20] sm:$0xff] %v57
          %v59 = vld [vmem:[%s51 + $0x18] sm:$0xff]
          %60 = vst [vmem:[%s52 + $0x28] sm:$0xff] %v59
          %v61 = vld [vmem:[%s51 + $0x20] sm:$0xff]
          %62 = vst [vmem:[%s52 + $0x40] sm:$0xff] %v61
          %v63 = vld [vmem:[%s51 + $0x28] sm:$0xff]
          %64 = vst [vmem:[%s52 + $0x48] sm:$0xff] %v63
          %v65 = vld [vmem:[%s51 + $0x30] sm:$0xff]
          %66 = vst [vmem:[%s52 + $0x60] sm:$0xff] %v65
          %v67 = vld [vmem:[%s51 + $0x38] sm:$0xff]
          %68 = vst [vmem:[%s52 + $0x68] sm:$0xff] %v67
        $region33: #{tpu_custom_call.1} parent=27 // loop_footer
          %s50 = sadd.s32 1, %s46
        $region34: #{tpu_custom_call.1} parent=27 // loop_footer_branch
          %45 = sbr.rel target = $region30
        $region35: #{tpu_custom_call.1} parent=27 // loop_exit
          _
      $region28: #{tpu_custom_call.1} parent=12 // pred_fallthru
        _
      %p69 = pneg %p41
      // Predicated region
      $region36: #{tpu_custom_call.1} parent=12 // pred_check
        _
      $region37: #{tpu_custom_call.1} parent=12 // pred_check_branch
        %71 = sbr.rel (%p41) target = $region39
      $region38: #{tpu_custom_call.1} parent=12 // pred_region
        %s72 = sand.u32 16, 7
      $region39: #{tpu_custom_call.1} parent=12 // pred_fallthru
        _
    $region13: #{tpu_custom_call.1} parent=1 // pred_fallthru
      _
    // Predicated region
    $region14: #{tpu_custom_call.1} parent=1 // pred_check
      %p19 = pneg %p15
    $region15: #{tpu_custom_call.1} parent=1 // pred_check_branch
      %21 = sbr.rel (%p19) target = $region17
    $region16: #{tpu_custom_call.1} parent=1 // pred_region
      %s22 = sshll.u32 1, 16
      %s23 = ssub.s32 %s22, 1
      loop: start=0, step=1, limit=1
      $region18: #{tpu_custom_call.1} parent=16 // loop_pre_header
        _
      $region19: #{tpu_custom_call.1} parent=16 // loop_header
        %s25 = sphi 0, %s29
        %p26 = scmp.ge.s32.totalorder %s25, 1
        %s30 = sphi %s0, %s0
        %s31 = sphi [#allocation2], [#allocation2]
      $region20: #{tpu_custom_call.1} parent=16 // loop_header_branch
        %28 = sbr.rel (%p26) target = $region24
      $region21: #{tpu_custom_call.1} parent=16 // loop_body
        %v32 = vld [vmem:[%s30] sm:%s23]
        %33 = vst [vmem:[%s31] sm:%s23] %v32
        %v34 = vld [vmem:[%s30 + $0x10] sm:%s23]
        %35 = vst [vmem:[%s31 + $0x20] sm:%s23] %v34
        %v36 = vld [vmem:[%s30 + $0x20] sm:%s23]
        %37 = vst [vmem:[%s31 + $0x40] sm:%s23] %v36
        %v38 = vld [vmem:[%s30 + $0x30] sm:%s23]
        %39 = vst [vmem:[%s31 + $0x60] sm:%s23] %v38
      $region22: #{tpu_custom_call.1} parent=16 // loop_footer
        %s29 = sadd.s32 1, %s25
      $region23: #{tpu_custom_call.1} parent=16 // loop_footer_branch
        %24 = sbr.rel target = $region19
      $region24: #{tpu_custom_call.1} parent=16 // loop_exit
        _
    $region17: #{tpu_custom_call.1} parent=1 // pred_fallthru
      _
    // Predicated region
    $region40: #{tpu_custom_call.1} parent=1 // pred_check
      _
    $region41: #{tpu_custom_call.1} parent=1 // pred_check_branch
      %75 = sbr.rel (0) target = $region43
    $region42: #{tpu_custom_call.1} parent=1 // pred_region
      %76 = vsyncadd [#allocation3], 1024
    $region43: #{tpu_custom_call.1} parent=1 // pred_fallthru
      _
    %s77 = scalar_lea.vmem %s0, 64
    %s78 = scalar_lea.vmem [#allocation2], 16
    %s79 = scalar_lea.sflag [#allocation3], 1
    %p81 = scmp.lt.u32.totalorder 16, 8
    %p82 = pneg %p81
    // Predicated region
    $region44: #{tpu_custom_call.1} parent=1 // pred_check
      _
    $region45: #{tpu_custom_call.1} parent=1 // pred_check_branch
      %84 = sbr.rel (%p81) target = $region47
    $region46: #{tpu_custom_call.1} parent=1 // pred_region
      %s106 = sand.u32 16, 7
      %p107 = scmp.eq.s32.totalorder %s106, 0
      // Predicated region
      $region59: #{tpu_custom_call.1} parent=46 // pred_check
        %p108 = pneg %p107
      $region60: #{tpu_custom_call.1} parent=46 // pred_check_branch
        %110 = sbr.rel (%p108) target = $region62
      $region61: #{tpu_custom_call.1} parent=46 // pred_region
        loop: start=0, step=1, limit=1
        $region63: #{tpu_custom_call.1} parent=61 // loop_pre_header
          _
        $region64: #{tpu_custom_call.1} parent=61 // loop_header
          %s112 = sphi 0, %s116
          %p113 = scmp.ge.s32.totalorder %s112, 1
          %s117 = sphi %s77, %s77
          %s118 = sphi %s78, %s78
        $region65: #{tpu_custom_call.1} parent=61 // loop_header_branch
          %115 = sbr.rel (%p113) target = $region69
        $region66: #{tpu_custom_call.1} parent=61 // loop_body
          %v119 = vld [vmem:[%s117] sm:$0xff]
          %120 = vst [vmem:[%s118] sm:$0xff] %v119
          %v121 = vld [vmem:[%s117 + $0x8] sm:$0xff]
          %122 = vst [vmem:[%s118 + $0x8] sm:$0xff] %v121
          %v123 = vld [vmem:[%s117 + $0x10] sm:$0xff]
          %124 = vst [vmem:[%s118 + $0x20] sm:$0xff] %v123
          %v125 = vld [vmem:[%s117 + $0x18] sm:$0xff]
          %126 = vst [vmem:[%s118 + $0x28] sm:$0xff] %v125
          %v127 = vld [vmem:[%s117 + $0x20] sm:$0xff]
          %128 = vst [vmem:[%s118 + $0x40] sm:$0xff] %v127
          %v129 = vld [vmem:[%s117 + $0x28] sm:$0xff]
          %130 = vst [vmem:[%s118 + $0x48] sm:$0xff] %v129
          %v131 = vld [vmem:[%s117 + $0x30] sm:$0xff]
          %132 = vst [vmem:[%s118 + $0x60] sm:$0xff] %v131
          %v133 = vld [vmem:[%s117 + $0x38] sm:$0xff]
          %134 = vst [vmem:[%s118 + $0x68] sm:$0xff] %v133
        $region67: #{tpu_custom_call.1} parent=61 // loop_footer
          %s116 = sadd.s32 1, %s112
        $region68: #{tpu_custom_call.1} parent=61 // loop_footer_branch
          %111 = sbr.rel target = $region64
        $region69: #{tpu_custom_call.1} parent=61 // loop_exit
          _
      $region62: #{tpu_custom_call.1} parent=46 // pred_fallthru
        _
      %p135 = pneg %p107
      // Predicated region
      $region70: #{tpu_custom_call.1} parent=46 // pred_check
        _
      $region71: #{tpu_custom_call.1} parent=46 // pred_check_branch
        %137 = sbr.rel (%p107) target = $region73
      $region72: #{tpu_custom_call.1} parent=46 // pred_region
        %s138 = sand.u32 16, 7
      $region73: #{tpu_custom_call.1} parent=46 // pred_fallthru
        _
    $region47: #{tpu_custom_call.1} parent=1 // pred_fallthru
      _
    // Predicated region
    $region48: #{tpu_custom_call.1} parent=1 // pred_check
      %p85 = pneg %p81
    $region49: #{tpu_custom_call.1} parent=1 // pred_check_branch
      %87 = sbr.rel (%p85) target = $region51
    $region50: #{tpu_custom_call.1} parent=1 // pred_region
      %s88 = sshll.u32 1, 16
      %s89 = ssub.s32 %s88, 1
      loop: start=0, step=1, limit=1
      $region52: #{tpu_custom_call.1} parent=50 // loop_pre_header
        _
      $region53: #{tpu_custom_call.1} parent=50 // loop_header
        %s91 = sphi 0, %s95
        %p92 = scmp.ge.s32.totalorder %s91, 1
        %s96 = sphi %s77, %s77
        %s97 = sphi %s78, %s78
      $region54: #{tpu_custom_call.1} parent=50 // loop_header_branch
        %94 = sbr.rel (%p92) target = $region58
      $region55: #{tpu_custom_call.1} parent=50 // loop_body
        %v98 = vld [vmem:[%s96] sm:%s89]
        %99 = vst [vmem:[%s97] sm:%s89] %v98
        %v100 = vld [vmem:[%s96 + $0x10] sm:%s89]
        %101 = vst [vmem:[%s97 + $0x20] sm:%s89] %v100
        %v102 = vld [vmem:[%s96 + $0x20] sm:%s89]
        %103 = vst [vmem:[%s97 + $0x40] sm:%s89] %v102
        %v104 = vld [vmem:[%s96 + $0x30] sm:%s89]
        %105 = vst [vmem:[%s97 + $0x60] sm:%s89] %v104
      $region56: #{tpu_custom_call.1} parent=50 // loop_footer
        %s95 = sadd.s32 1, %s91
      $region57: #{tpu_custom_call.1} parent=50 // loop_footer_branch
        %90 = sbr.rel target = $region53
      $region58: #{tpu_custom_call.1} parent=50 // loop_exit
        _
    $region51: #{tpu_custom_call.1} parent=1 // pred_fallthru
      _
    // Predicated region
    $region74: #{tpu_custom_call.1} parent=1 // pred_check
      _
    $region75: #{tpu_custom_call.1} parent=1 // pred_check_branch
      %141 = sbr.rel (0) target = $region77
    $region76: #{tpu_custom_call.1} parent=1 // pred_region
      %142 = vsyncadd %s79, 1024
    $region77: #{tpu_custom_call.1} parent=1 // pred_fallthru
      _
    %s143 = smul.u32 8, 4
    %s144 = smul.u32 %s143, 2
    %s145 = sshll.u32 %s144, 4
    %146 = dma.done [#allocation3], %s145
    %s147 = sshll.u32 %s144, 4
    %148 = dma.done %s79, %s147
    %v149 = vld [vmem:[#allocation2] sm:$0xff]
    %v150 = vld [vmem:[#allocation2 + $0x8] sm:$0xff]
    %v151 = vld [vmem:[#allocation2 + $0x10] sm:$0xff]
    %v152 = vld [vmem:[#allocation2 + $0x18] sm:$0xff]
    %v153 = vld [vmem:[#allocation2 + $0x20] sm:$0xff]
    %v154 = vld [vmem:[#allocation2 + $0x28] sm:$0xff]
    %v155 = vld [vmem:[#allocation2 + $0x30] sm:$0xff]
    %v156 = vld [vmem:[#allocation2 + $0x38] sm:$0xff]
    %v157 = vld [vmem:[#allocation2 + $0x40] sm:$0xff]
    %v158 = vld [vmem:[#allocation2 + $0x48] sm:$0xff]
    %v159 = vld [vmem:[#allocation2 + $0x50] sm:$0xff]
    %v160 = vld [vmem:[#allocation2 + $0x58] sm:$0xff]
    %v161 = vld [vmem:[#allocation2 + $0x60] sm:$0xff]
    %v162 = vld [vmem:[#allocation2 + $0x68] sm:$0xff]
    %v163 = vld [vmem:[#allocation2 + $0x70] sm:$0xff]
    %v164 = vld [vmem:[#allocation2 + $0x78] sm:$0xff]
    %v165 = vld [vmem:[%s1] sm:$0xf]
    %v166 = vld [vmem:[%s1 + $0x4] sm:$0xf]
    %v167 = vld [vmem:[%s1 + $0x8] sm:$0xf]
    %v168 = vpack.c.bf16 %v153, %v149
    %v169 = vpack.c.bf16 %v154, %v150
    %v170 = vpack.c.bf16 %v155, %v151
    %v171 = vpack.c.bf16 %v156, %v152
    %v172 = vpack.c.bf16 %v161, %v157
    %v173 = vpack.c.bf16 %v162, %v158
    %v174 = vpack.c.bf16 %v163, %v159
    %v175 = vpack.c.bf16 %v164, %v160
    %v176 = vld [vmem:[%s2] sm:$0xff]
    %v177 = vld [vmem:[%s2 + $0x8] sm:$0xff]
    %v178 = vld [vmem:[%s2 + $0x10] sm:$0xff]
    %180 = vset.pattern.permute.xlu0 0
    %181 = vperm.xlu0 %180, %v176
    %v182 = vpop.permute.xlu0 %181
    %185 = vset.pattern.permute.xlu0 0
    %186 = vperm.xlu0 %185, %v177
    %v187 = vpop.permute.xlu0 %186
    %190 = vset.pattern.permute.xlu0 0
    %191 = vperm.xlu0 %190, %v178
    %v192 = vpop.permute.xlu0 %191
    %v197 = vunpack.c.l.b16 %v165
    %v198 = vunpack.c.l.b16 %v166
    %v199 = vunpack.c.l.b16 %v167
    %v200 = vpack.c.b16 %v198, %v197
    %v201 = vpack.c.b16 %v199, %v199
    %vm202 = vcmask 261120
    %v204 = vsel %vm202, %v200, 0
    %v207 = vsel %vm202, %v201, 0
    %209 = vmatprep.subr.bf16.mxu0 0
    %210 = vmatpush1.bf16.msra.mxu0 0
    %211 = vmatprep.subr.bf16.mxu0 0
    %212 = vmatpush1.bf16.msra.mxu0 0
    %213 = vmatprep.subr.bf16.mxu0 0
    %214 = vmatpush1.bf16.msra.mxu0 0
    %215 = vmatprep.subr.bf16.mxu0 0
    %216 = vmatpush1.bf16.msra.mxu0 0
    %217 = vmatprep.subr.bf16.mxu0 0
    %218 = vmatpush1.bf16.msra.mxu0 0
    %219 = vmatprep.subr.bf16.mxu0 0
    %220 = vmatpush1.bf16.msra.mxu0 0
    %221 = vmatprep.subr.bf16.mxu0 %v173
    %222 = vmatpush1.bf16.msra.mxu0 %v172
    %223 = vmatprep.subr.bf16.mxu0 %v169
    %224 = vmatpush1.bf16.msra.mxu0 %v168
    %225 = vmatprep.subr.bf16.mxu0 0
    %226 = vmatpush2.bf16.msra.mxu0 0
    %227 = vmatprep.subr.bf16.mxu0 0
    %228 = vmatpush2.bf16.msra.mxu0 0
    %229 = vmatprep.subr.bf16.mxu0 0
    %230 = vmatpush2.bf16.msra.mxu0 0
    %231 = vmatprep.subr.bf16.mxu0 0
    %232 = vmatpush2.bf16.msra.mxu0 0
    %233 = vmatprep.subr.bf16.mxu0 0
    %234 = vmatpush2.bf16.msra.mxu0 0
    %235 = vmatprep.subr.bf16.mxu0 0
    %236 = vmatpush2.bf16.msra.mxu0 0
    %237 = vmatprep.subr.bf16.mxu0 0
    %238 = vmatpush2.bf16.msra.mxu0 0
    %239 = vmatprep.subr.bf16.mxu0 0
    %240 = vmatpush2.bf16.msra.mxu0 0
    %241 = vmatprep.mubr.bf16.mxu0 0
    %242 = vmatmul.mubr.bf16.gmra.mxu0 %v204
    %v243 = vpop.f32.mrf.mxu0
    %v244 = vadd.f32 %v182, %v243
    %v245 = vpop.f32.mrf.mxu0
    %v246 = vadd.f32 %v182, %v245
    %v247 = vpop.f32.mrf.mxu0
    %v248 = vadd.f32 %v187, %v247
    %v249 = vpop.f32.mrf.mxu0
    %v250 = vadd.f32 %v187, %v249
    %251 = vmatprep.mubr.bf16.mxu0 0
    %252 = vmatmul.mubr.bf16.gmra.mxu0 %v207
    %v253 = vpop.f32.mrf.mxu0
    %v254 = vadd.f32 %v192, %v253
    %v255 = vpop.f32.mrf.mxu0
    %v256 = vadd.f32 %v192, %v255
    %v257 = vpop.f32.mrf.mxu0
    %v258 = vpop.f32.mrf.mxu0
    %259 = vdwg.mxu0
    %260 = vmatprep.subr.bf16.mxu0 0
    %261 = vmatpush1.bf16.msra.mxu0 0
    %262 = vmatprep.subr.bf16.mxu0 0
    %263 = vmatpush1.bf16.msra.mxu0 0
    %264 = vmatprep.subr.bf16.mxu0 0
    %265 = vmatpush1.bf16.msra.mxu0 0
    %266 = vmatprep.subr.bf16.mxu0 0
    %267 = vmatpush1.bf16.msra.mxu0 0
    %268 = vmatprep.subr.bf16.mxu0 0
    %269 = vmatpush1.bf16.msra.mxu0 0
    %270 = vmatprep.subr.bf16.mxu0 0
    %271 = vmatpush1.bf16.msra.mxu0 0
    %272 = vmatprep.subr.bf16.mxu0 %v175
    %273 = vmatpush1.bf16.msra.mxu0 %v174
    %274 = vmatprep.subr.bf16.mxu0 %v171
    %275 = vmatpush1.bf16.msra.mxu0 %v170
    %276 = vmatprep.subr.bf16.mxu0 0
    %277 = vmatpush2.bf16.msra.mxu0 0
    %278 = vmatprep.subr.bf16.mxu0 0
    %279 = vmatpush2.bf16.msra.mxu0 0
    %280 = vmatprep.subr.bf16.mxu0 0
    %281 = vmatpush2.bf16.msra.mxu0 0
    %282 = vmatprep.subr.bf16.mxu0 0
    %283 = vmatpush2.bf16.msra.mxu0 0
    %284 = vmatprep.subr.bf16.mxu0 0
    %285 = vmatpush2.bf16.msra.mxu0 0
    %286 = vmatprep.subr.bf16.mxu0 0
    %287 = vmatpush2.bf16.msra.mxu0 0
    %288 = vmatprep.subr.bf16.mxu0 0
    %289 = vmatpush2.bf16.msra.mxu0 0
    %290 = vmatprep.subr.bf16.mxu0 0
    %291 = vmatpush2.bf16.msra.mxu0 0
    %292 = vmatprep.mubr.bf16.mxu0 0
    %293 = vmatmul.mubr.bf16.gmra.mxu0 %v204
    %v294 = vpop.f32.mrf.mxu0
    %v295 = vadd.f32 %v182, %v294
    %v296 = vpop.f32.mrf.mxu0
    %v297 = vadd.f32 %v182, %v296
    %v298 = vpop.f32.mrf.mxu0
    %v299 = vadd.f32 %v187, %v298
    %v300 = vpop.f32.mrf.mxu0
    %v301 = vadd.f32 %v187, %v300
    %302 = vmatprep.mubr.bf16.mxu0 0
    %303 = vmatmul.mubr.bf16.gmra.mxu0 %v207
    %v304 = vpop.f32.mrf.mxu0
    %v305 = vadd.f32 %v192, %v304
    %v306 = vpop.f32.mrf.mxu0
    %v307 = vadd.f32 %v192, %v306
    %v308 = vpop.f32.mrf.mxu0
    %v309 = vpop.f32.mrf.mxu0
    %310 = vdwg.mxu0
    %v311 = vld [vmem:[%s1 + $0x10] sm:$0xf]
    %v312 = vld [vmem:[%s1 + $0x14] sm:$0xf]
    %vm313 = vcmp.gt.f32.partialorder %v244, 0.0
    %vm314 = vcmp.gt.f32.partialorder %v246, 0.0
    %vm315 = vcmp.gt.f32.partialorder %v295, 0.0
    %vm316 = vcmp.gt.f32.partialorder %v297, 0.0
    %vm317 = vcmp.gt.f32.partialorder %v248, 0.0
    %vm318 = vcmp.gt.f32.partialorder %v250, 0.0
    %vm319 = vcmp.gt.f32.partialorder %v299, 0.0
    %vm320 = vcmp.gt.f32.partialorder %v301, 0.0
    %vm321 = vcmp.gt.f32.partialorder %v254, 0.0
    %vm322 = vcmp.gt.f32.partialorder %v256, 0.0
    %vm323 = vcmp.gt.f32.partialorder %v305, 0.0
    %vm324 = vcmp.gt.f32.partialorder %v307, 0.0
    %v325 = vmul.f32 %v244, 0.2
    %v326 = vmul.f32 %v246, 0.2
    %v327 = vmul.f32 %v295, 0.2
    %v328 = vmul.f32 %v297, 0.2
    %v329 = vmul.f32 %v248, 0.2
    %v330 = vmul.f32 %v250, 0.2
    %v331 = vmul.f32 %v299, 0.2
    %v332 = vmul.f32 %v301, 0.2
    %v333 = vmul.f32 %v254, 0.2
    %v334 = vmul.f32 %v256, 0.2
    %v335 = vmul.f32 %v305, 0.2
    %v336 = vmul.f32 %v307, 0.2
    %v337 = vsel %vm313, %v244, %v325
    %v338 = vsel %vm314, %v246, %v326
    %v339 = vsel %vm315, %v295, %v327
    %v340 = vsel %vm316, %v297, %v328
    %v341 = vsel %vm317, %v248, %v329
    %v342 = vsel %vm318, %v250, %v330
    %v343 = vsel %vm319, %v299, %v331
    %v344 = vsel %vm320, %v301, %v332
    %v345 = vsel %vm321, %v254, %v333
    %v346 = vsel %vm322, %v256, %v334
    %v347 = vsel %vm323, %v305, %v335
    %v348 = vsel %vm324, %v307, %v336
    %v349 = vpack.c.bf16 %v341, %v337
    %v350 = vpack.c.bf16 %v342, %v338
    %v351 = vpack.c.bf16 %v343, %v339
    %v352 = vpack.c.bf16 %v344, %v340
    %v353 = vpack.c.bf16 %v345, %v345
    %v354 = vpack.c.bf16 %v346, %v346
    %v355 = vpack.c.bf16 %v347, %v347
    %v356 = vpack.c.bf16 %v348, %v348
    %v359 = vunpack.c.l.b16 %v311
    %v360 = vunpack.c.l.b16 %v312
    %v361 = vpack.c.b16 %v360, %v359
    %vm362 = vcmask 195584
    %v364 = vsel %vm362, %v361, 0
    %vm366 = vcmask 1043456
    %v368 = vsel %vm366, %v353, 0
    %v371 = vsel %vm366, %v354, 0
    %v374 = vsel %vm366, %v355, 0
    %v377 = vsel %vm366, %v356, 0
    %379 = vmatprep.subr.bf16.mxu0 0
    %380 = vmatpush1.bf16.msra.mxu0 0
    %381 = vmatprep.subr.bf16.mxu0 0
    %382 = vmatpush1.bf16.msra.mxu0 0
    %383 = vmatprep.subr.bf16.mxu0 0
    %384 = vmatpush1.bf16.msra.mxu0 0
    %385 = vmatprep.subr.bf16.mxu0 0
    %386 = vmatpush1.bf16.msra.mxu0 0
    %387 = vmatprep.subr.bf16.mxu0 0
    %388 = vmatpush1.bf16.msra.mxu0 0
    %389 = vmatprep.subr.bf16.mxu0 0
    %390 = vmatpush1.bf16.msra.mxu0 0
    %391 = vmatprep.subr.bf16.mxu0 %v371
    %392 = vmatpush1.bf16.msra.mxu0 %v368
    %393 = vmatprep.subr.bf16.mxu0 %v350
    %394 = vmatpush1.bf16.msra.mxu0 %v349
    %395 = vmatprep.subr.bf16.mxu0 0
    %396 = vmatpush2.bf16.msra.mxu0 0
    %397 = vmatprep.subr.bf16.mxu0 0
    %398 = vmatpush2.bf16.msra.mxu0 0
    %399 = vmatprep.subr.bf16.mxu0 0
    %400 = vmatpush2.bf16.msra.mxu0 0
    %401 = vmatprep.subr.bf16.mxu0 0
    %402 = vmatpush2.bf16.msra.mxu0 0
    %403 = vmatprep.subr.bf16.mxu0 0
    %404 = vmatpush2.bf16.msra.mxu0 0
    %405 = vmatprep.subr.bf16.mxu0 0
    %406 = vmatpush2.bf16.msra.mxu0 0
    %407 = vmatprep.subr.bf16.mxu0 0
    %408 = vmatpush2.bf16.msra.mxu0 0
    %409 = vmatprep.subr.bf16.mxu0 0
    %410 = vmatpush2.bf16.msra.mxu0 0
    %411 = vmatprep.mubr.bf16.mxu0 0
    %412 = vmatmul.mubr.bf16.gmra.mxu0 %v364
    %v413 = vpop.f32.mrf.mxu0
    %v414 = vadd.f32 0.0, %v413
    %v415 = vpop.f32.mrf.mxu0
    %v416 = vadd.f32 0.0, %v415
    %v417 = vpop.f32.mrf.mxu0
    %v418 = vadd.f32 0.0, %v417
    %v419 = vpop.f32.mrf.mxu0
    %v420 = vadd.f32 0.0, %v419
    %421 = vdwg.mxu0
    %422 = vmatprep.subr.bf16.mxu0 0
    %423 = vmatpush1.bf16.msra.mxu0 0
    %424 = vmatprep.subr.bf16.mxu0 0
    %425 = vmatpush1.bf16.msra.mxu0 0
    %426 = vmatprep.subr.bf16.mxu0 0
    %427 = vmatpush1.bf16.msra.mxu0 0
    %428 = vmatprep.subr.bf16.mxu0 0
    %429 = vmatpush1.bf16.msra.mxu0 0
    %430 = vmatprep.subr.bf16.mxu0 0
    %431 = vmatpush1.bf16.msra.mxu0 0
    %432 = vmatprep.subr.bf16.mxu0 0
    %433 = vmatpush1.bf16.msra.mxu0 0
    %434 = vmatprep.subr.bf16.mxu0 %v377
    %435 = vmatpush1.bf16.msra.mxu0 %v374
    %436 = vmatprep.subr.bf16.mxu0 %v352
    %437 = vmatpush1.bf16.msra.mxu0 %v351
    %438 = vmatprep.subr.bf16.mxu0 0
    %439 = vmatpush2.bf16.msra.mxu0 0
    %440 = vmatprep.subr.bf16.mxu0 0
    %441 = vmatpush2.bf16.msra.mxu0 0
    %442 = vmatprep.subr.bf16.mxu0 0
    %443 = vmatpush2.bf16.msra.mxu0 0
    %444 = vmatprep.subr.bf16.mxu0 0
    %445 = vmatpush2.bf16.msra.mxu0 0
    %446 = vmatprep.subr.bf16.mxu0 0
    %447 = vmatpush2.bf16.msra.mxu0 0
    %448 = vmatprep.subr.bf16.mxu0 0
    %449 = vmatpush2.bf16.msra.mxu0 0
    %450 = vmatprep.subr.bf16.mxu0 0
    %451 = vmatpush2.bf16.msra.mxu0 0
    %452 = vmatprep.subr.bf16.mxu0 0
    %453 = vmatpush2.bf16.msra.mxu0 0
    %454 = vmatprep.mubr.bf16.mxu0 0
    %455 = vmatmul.mubr.bf16.gmra.mxu0 %v364
    %v456 = vpop.f32.mrf.mxu0
    %v457 = vadd.f32 0.0, %v456
    %v458 = vpop.f32.mrf.mxu0
    %v459 = vadd.f32 0.0, %v458
    %v460 = vpop.f32.mrf.mxu0
    %v461 = vadd.f32 0.0, %v460
    %v462 = vpop.f32.mrf.mxu0
    %v463 = vadd.f32 0.0, %v462
    %464 = vdwg.mxu0
    %v465 = vld [vmem:[%s2 + $0x18] sm:$0xff]
    %v466 = vld [vmem:[%s2 + $0x20] sm:$0xff]
    %v467 = vld [vmem:[%s2 + $0x28] sm:$0xff]
    %v468 = vld [vmem:[%s2 + $0x30] sm:$0xff]
    %v469 = vadd.f32 %v414, %v416
    %v470 = vadd.f32 %v469, %v457
    %v471 = vadd.f32 %v470, %v459
    %472 = vadd.xlane.f32.xlu0 %v471
    %v473 = vpop.xlane.xlu0 %472
    %v474 = vadd.f32 %v418, %v420
    %v475 = vadd.f32 %v474, %v461
    %v476 = vadd.f32 %v475, %v463
    %477 = vadd.xlane.f32.xlu0 %v476
    %v478 = vpop.xlane.xlu0 %477
    %v479 = vmul.f32 %v473, 0.001953125
    %v480 = vmul.f32 %v478, 0.001953125
    %v481 = vmul.f32 %v414, %v414
    %v482 = vmul.f32 %v416, %v416
    %v483 = vmul.f32 %v457, %v457
    %v484 = vmul.f32 %v459, %v459
    %v485 = vmul.f32 %v418, %v418
    %v486 = vmul.f32 %v420, %v420
    %v487 = vmul.f32 %v461, %v461
    %v488 = vmul.f32 %v463, %v463
    %v489 = vadd.f32 %v481, %v482
    %v490 = vadd.f32 %v489, %v483
    %v491 = vadd.f32 %v490, %v484
    %492 = vadd.xlane.f32.xlu0 %v491
    %v493 = vpop.xlane.xlu0 %492
    %v494 = vadd.f32 %v485, %v486
    %v495 = vadd.f32 %v494, %v487
    %v496 = vadd.f32 %v495, %v488
    %497 = vadd.xlane.f32.xlu0 %v496
    %v498 = vpop.xlane.xlu0 %497
    %v499 = vmul.f32 %v493, 0.001953125
    %v500 = vmul.f32 %v498, 0.001953125
    %v501 = vmul.f32 %v479, %v479
    %v502 = vmul.f32 %v480, %v480
    %v503 = vsub.f32 %v499, %v501
    %v504 = vsub.f32 %v500, %v502
    %v505 = vmax.f32 %v503, 0.0
    %v506 = vmax.f32 %v504, 0.0
    %v507 = vadd.f32 %v505, 1e-05
    %v508 = vadd.f32 %v506, 1e-05
    %v509 = vrsqrt.pop %v507
    %v510 = vrsqrt.pop %v508
    %v511 = vmul.f32 %v509, %v465
    %v512 = vmul.f32 %v510, %v466
    %v513 = vmul.f32 %v479, %v511
    %v514 = vmul.f32 %v480, %v512
    %v515 = vsub.f32 %v467, %v513
    %v516 = vsub.f32 %v468, %v514
    %518 = vset.pattern.permute.xlu0 0
    %519 = vperm.xlu0 %518, %v511
    %v520 = vpop.permute.xlu0 %519
    %523 = vset.pattern.permute.xlu0 0
    %524 = vperm.xlu0 %523, %v512
    %v525 = vpop.permute.xlu0 %524
    %v527 = vmul.f32 %v414, %v520
    %v528 = vmul.f32 %v416, %v520
    %v529 = vmul.f32 %v457, %v520
    %v530 = vmul.f32 %v459, %v520
    %v531 = vmul.f32 %v418, %v525
    %v532 = vmul.f32 %v420, %v525
    %v533 = vmul.f32 %v461, %v525
    %v534 = vmul.f32 %v463, %v525
    %536 = vset.pattern.permute.xlu0 0
    %537 = vperm.xlu0 %536, %v515
    %v538 = vpop.permute.xlu0 %537
    %541 = vset.pattern.permute.xlu0 0
    %542 = vperm.xlu0 %541, %v516
    %v543 = vpop.permute.xlu0 %542
    %v545 = vadd.f32 %v527, %v538
    %v546 = vadd.f32 %v528, %v538
    %v547 = vadd.f32 %v529, %v538
    %v548 = vadd.f32 %v530, %v538
    %v549 = vadd.f32 %v531, %v543
    %v550 = vadd.f32 %v532, %v543
    %v551 = vadd.f32 %v533, %v543
    %v552 = vadd.f32 %v534, %v543
    %v553 = vld [vmem:[%s1 + $0x18] sm:$0xf]
    %v554 = vld [vmem:[%s1 + $0x1c] sm:$0xf]
    %vm555 = vcmp.gt.f32.partialorder %v545, 0.0
    %vm556 = vcmp.gt.f32.partialorder %v546, 0.0
    %vm557 = vcmp.gt.f32.partialorder %v547, 0.0
    %vm558 = vcmp.gt.f32.partialorder %v548, 0.0
    %vm559 = vcmp.gt.f32.partialorder %v549, 0.0
    %vm560 = vcmp.gt.f32.partialorder %v550, 0.0
    %vm561 = vcmp.gt.f32.partialorder %v551, 0.0
    %vm562 = vcmp.gt.f32.partialorder %v552, 0.0
    %v563 = vmul.f32 %v545, 0.2
    %v564 = vmul.f32 %v546, 0.2
    %v565 = vmul.f32 %v547, 0.2
    %v566 = vmul.f32 %v548, 0.2
    %v567 = vmul.f32 %v549, 0.2
    %v568 = vmul.f32 %v550, 0.2
    %v569 = vmul.f32 %v551, 0.2
    %v570 = vmul.f32 %v552, 0.2
    %v571 = vsel %vm555, %v545, %v563
    %v572 = vsel %vm556, %v546, %v564
    %v573 = vsel %vm557, %v547, %v565
    %v574 = vsel %vm558, %v548, %v566
    %v575 = vsel %vm559, %v549, %v567
    %v576 = vsel %vm560, %v550, %v568
    %v577 = vsel %vm561, %v551, %v569
    %v578 = vsel %vm562, %v552, %v570
    %v579 = vpack.c.bf16 %v575, %v571
    %v580 = vpack.c.bf16 %v576, %v572
    %v581 = vpack.c.bf16 %v577, %v573
    %v582 = vpack.c.bf16 %v578, %v574
    %v585 = vunpack.c.l.b16 %v553
    %v586 = vunpack.c.l.b16 %v554
    %v587 = vpack.c.b16 %v586, %v585
    %vm588 = vcmask 130048
    %v590 = vsel %vm588, %v587, 0
    %592 = vmatprep.subr.bf16.mxu0 0
    %593 = vmatpush1.bf16.msra.mxu0 0
    %594 = vmatprep.subr.bf16.mxu0 0
    %595 = vmatpush1.bf16.msra.mxu0 0
    %596 = vmatprep.subr.bf16.mxu0 0
    %597 = vmatpush1.bf16.msra.mxu0 0
    %598 = vmatprep.subr.bf16.mxu0 0
    %599 = vmatpush1.bf16.msra.mxu0 0
    %600 = vmatprep.subr.bf16.mxu0 0
    %601 = vmatpush1.bf16.msra.mxu0 0
    %602 = vmatprep.subr.bf16.mxu0 0
    %603 = vmatpush1.bf16.msra.mxu0 0
    %604 = vmatprep.subr.bf16.mxu0 0
    %605 = vmatpush1.bf16.msra.mxu0 0
    %606 = vmatprep.subr.bf16.mxu0 %v580
    %607 = vmatpush1.bf16.msra.mxu0 %v579
    %608 = vmatprep.subr.bf16.mxu0 0
    %609 = vmatpush2.bf16.msra.mxu0 0
    %610 = vmatprep.subr.bf16.mxu0 0
    %611 = vmatpush2.bf16.msra.mxu0 0
    %612 = vmatprep.subr.bf16.mxu0 0
    %613 = vmatpush2.bf16.msra.mxu0 0
    %614 = vmatprep.subr.bf16.mxu0 0
    %615 = vmatpush2.bf16.msra.mxu0 0
    %616 = vmatprep.subr.bf16.mxu0 0
    %617 = vmatpush2.bf16.msra.mxu0 0
    %618 = vmatprep.subr.bf16.mxu0 0
    %619 = vmatpush2.bf16.msra.mxu0 0
    %620 = vmatprep.subr.bf16.mxu0 0
    %621 = vmatpush2.bf16.msra.mxu0 0
    %622 = vmatprep.subr.bf16.mxu0 0
    %623 = vmatpush2.bf16.msra.mxu0 0
    %624 = vmatprep.mubr.bf16.mxu0 0
    %625 = vmatmul.mubr.bf16.gmra.mxu0 %v590
    %v626 = vpop.f32.mrf.mxu0
    %v627 = vadd.f32 0.0, %v626
    %v628 = vpop.f32.mrf.mxu0
    %v629 = vadd.f32 0.0, %v628
    %v630 = vpop.f32.mrf.mxu0
    %v631 = vadd.f32 0.0, %v630
    %v632 = vpop.f32.mrf.mxu0
    %v633 = vadd.f32 0.0, %v632
    %634 = vdwg.mxu0
    %635 = vmatprep.subr.bf16.mxu0 0
    %636 = vmatpush1.bf16.msra.mxu0 0
    %637 = vmatprep.subr.bf16.mxu0 0
    %638 = vmatpush1.bf16.msra.mxu0 0
    %639 = vmatprep.subr.bf16.mxu0 0
    %640 = vmatpush1.bf16.msra.mxu0 0
    %641 = vmatprep.subr.bf16.mxu0 0
    %642 = vmatpush1.bf16.msra.mxu0 0
    %643 = vmatprep.subr.bf16.mxu0 0
    %644 = vmatpush1.bf16.msra.mxu0 0
    %645 = vmatprep.subr.bf16.mxu0 0
    %646 = vmatpush1.bf16.msra.mxu0 0
    %647 = vmatprep.subr.bf16.mxu0 0
    %648 = vmatpush1.bf16.msra.mxu0 0
    %649 = vmatprep.subr.bf16.mxu0 %v582
    %650 = vmatpush1.bf16.msra.mxu0 %v581
    %651 = vmatprep.subr.bf16.mxu0 0
    %652 = vmatpush2.bf16.msra.mxu0 0
    %653 = vmatprep.subr.bf16.mxu0 0
    %654 = vmatpush2.bf16.msra.mxu0 0
    %655 = vmatprep.subr.bf16.mxu0 0
    %656 = vmatpush2.bf16.msra.mxu0 0
    %657 = vmatprep.subr.bf16.mxu0 0
    %658 = vmatpush2.bf16.msra.mxu0 0
    %659 = vmatprep.subr.bf16.mxu0 0
    %660 = vmatpush2.bf16.msra.mxu0 0
    %661 = vmatprep.subr.bf16.mxu0 0
    %662 = vmatpush2.bf16.msra.mxu0 0
    %663 = vmatprep.subr.bf16.mxu0 0
    %664 = vmatpush2.bf16.msra.mxu0 0
    %665 = vmatprep.subr.bf16.mxu0 0
    %666 = vmatpush2.bf16.msra.mxu0 0
    %667 = vmatprep.mubr.bf16.mxu0 0
    %668 = vmatmul.mubr.bf16.gmra.mxu0 %v590
    %v669 = vpop.f32.mrf.mxu0
    %v670 = vadd.f32 0.0, %v669
    %v671 = vpop.f32.mrf.mxu0
    %v672 = vadd.f32 0.0, %v671
    %v673 = vpop.f32.mrf.mxu0
    %v674 = vadd.f32 0.0, %v673
    %v675 = vpop.f32.mrf.mxu0
    %v676 = vadd.f32 0.0, %v675
    %677 = vdwg.mxu0
    %v678 = vld [vmem:[%s2 + $0x38] sm:$0xff]
    %v679 = vld [vmem:[%s2 + $0x40] sm:$0xff]
    %v680 = vld [vmem:[%s2 + $0x48] sm:$0xff]
    %v681 = vld [vmem:[%s2 + $0x50] sm:$0xff]
    %v682 = vadd.f32 %v627, %v629
    %v683 = vadd.f32 %v682, %v670
    %v684 = vadd.f32 %v683, %v672
    %685 = vadd.xlane.f32.xlu0 %v684
    %v686 = vpop.xlane.xlu0 %685
    %v687 = vadd.f32 %v631, %v633
    %v688 = vadd.f32 %v687, %v674
    %v689 = vadd.f32 %v688, %v676
    %690 = vadd.xlane.f32.xlu0 %v689
    %v691 = vpop.xlane.xlu0 %690
    %v692 = vmul.f32 %v686, 0.001953125
    %v693 = vmul.f32 %v691, 0.001953125
    %v694 = vmul.f32 %v627, %v627
    %v695 = vmul.f32 %v629, %v629
    %v696 = vmul.f32 %v670, %v670
    %v697 = vmul.f32 %v672, %v672
    %v698 = vmul.f32 %v631, %v631
    %v699 = vmul.f32 %v633, %v633
    %v700 = vmul.f32 %v674, %v674
    %v701 = vmul.f32 %v676, %v676
    %v702 = vadd.f32 %v694, %v695
    %v703 = vadd.f32 %v702, %v696
    %v704 = vadd.f32 %v703, %v697
    %705 = vadd.xlane.f32.xlu0 %v704
    %v706 = vpop.xlane.xlu0 %705
    %v707 = vadd.f32 %v698, %v699
    %v708 = vadd.f32 %v707, %v700
    %v709 = vadd.f32 %v708, %v701
    %710 = vadd.xlane.f32.xlu0 %v709
    %v711 = vpop.xlane.xlu0 %710
    %v712 = vmul.f32 %v706, 0.001953125
    %v713 = vmul.f32 %v711, 0.001953125
    %v714 = vmul.f32 %v692, %v692
    %v715 = vmul.f32 %v693, %v693
    %v716 = vsub.f32 %v712, %v714
    %v717 = vsub.f32 %v713, %v715
    %v718 = vmax.f32 %v716, 0.0
    %v719 = vmax.f32 %v717, 0.0
    %v720 = vadd.f32 %v718, 1e-05
    %v721 = vadd.f32 %v719, 1e-05
    %v722 = vrsqrt.pop %v720
    %v723 = vrsqrt.pop %v721
    %v724 = vmul.f32 %v722, %v678
    %v725 = vmul.f32 %v723, %v679
    %v726 = vmul.f32 %v692, %v724
    %v727 = vmul.f32 %v693, %v725
    %v728 = vsub.f32 %v680, %v726
    %v729 = vsub.f32 %v681, %v727
    %731 = vset.pattern.permute.xlu0 0
    %732 = vperm.xlu0 %731, %v724
    %v733 = vpop.permute.xlu0 %732
    %736 = vset.pattern.permute.xlu0 0
    %737 = vperm.xlu0 %736, %v725
    %v738 = vpop.permute.xlu0 %737
    %v740 = vmul.f32 %v627, %v733
    %v741 = vmul.f32 %v629, %v733
    %v742 = vmul.f32 %v670, %v733
    %v743 = vmul.f32 %v672, %v733
    %v744 = vmul.f32 %v631, %v738
    %v745 = vmul.f32 %v633, %v738
    %v746 = vmul.f32 %v674, %v738
    %v747 = vmul.f32 %v676, %v738
    %749 = vset.pattern.permute.xlu0 0
    %750 = vperm.xlu0 %749, %v728
    %v751 = vpop.permute.xlu0 %750
    %754 = vset.pattern.permute.xlu0 0
    %755 = vperm.xlu0 %754, %v729
    %v756 = vpop.permute.xlu0 %755
    %v758 = vadd.f32 %v740, %v751
    %v759 = vadd.f32 %v741, %v751
    %v760 = vadd.f32 %v742, %v751
    %v761 = vadd.f32 %v743, %v751
    %v762 = vadd.f32 %v744, %v756
    %v763 = vadd.f32 %v745, %v756
    %v764 = vadd.f32 %v746, %v756
    %v765 = vadd.f32 %v747, %v756
    %v766 = vld [vmem:[%s1 + $0x20] sm:$0xf]
    %v767 = vld [vmem:[%s1 + $0x24] sm:$0xf]
    %v768 = vld [vmem:[%s1 + $0x28] sm:$0xf]
    %v769 = vmax.f32 %v545, 0.0
    %v770 = vmax.f32 %v546, 0.0
    %v771 = vmax.f32 %v547, 0.0
    %v772 = vmax.f32 %v548, 0.0
    %v773 = vmax.f32 %v549, 0.0
    %v774 = vmax.f32 %v550, 0.0
    %v775 = vmax.f32 %v551, 0.0
    %v776 = vmax.f32 %v552, 0.0
    %v777 = vpack.c.bf16 %v773, %v769
    %v778 = vpack.c.bf16 %v774, %v770
    %v779 = vpack.c.bf16 %v775, %v771
    %v780 = vpack.c.bf16 %v776, %v772
    %v781 = vld [vmem:[%s1 + $0x30] sm:$0xf]
    %v782 = vld [vmem:[%s1 + $0x34] sm:$0xf]
    %v783 = vld [vmem:[%s1 + $0x38] sm:$0xf]
    %v784 = vmax.f32 %v758, 0.0
    %v785 = vmax.f32 %v759, 0.0
    %v786 = vmax.f32 %v760, 0.0
    %v787 = vmax.f32 %v761, 0.0
    %v788 = vmax.f32 %v762, 0.0
    %v789 = vmax.f32 %v763, 0.0
    %v790 = vmax.f32 %v764, 0.0
    %v791 = vmax.f32 %v765, 0.0
    %v792 = vpack.c.bf16 %v788, %v784
    %v793 = vpack.c.bf16 %v789, %v785
    %v794 = vpack.c.bf16 %v790, %v786
    %v795 = vpack.c.bf16 %v791, %v787
    %v799 = vunpack.c.l.b16 %v781
    %v800 = vunpack.c.l.b16 %v782
    %v801 = vunpack.c.l.b16 %v783
    %v802 = vpack.c.b16 %v800, %v799
    %v803 = vpack.c.b16 %v801, %v801
    %v805 = vsel %vm588, %v802, 0
    %v808 = vsel %vm588, %v803, 0
    %810 = vmatprep.subr.bf16.mxu0 0
    %811 = vmatpush1.bf16.msra.mxu0 0
    %812 = vmatprep.subr.bf16.mxu0 0
    %813 = vmatpush1.bf16.msra.mxu0 0
    %814 = vmatprep.subr.bf16.mxu0 0
    %815 = vmatpush1.bf16.msra.mxu0 0
    %816 = vmatprep.subr.bf16.mxu0 0
    %817 = vmatpush1.bf16.msra.mxu0 0
    %818 = vmatprep.subr.bf16.mxu0 0
    %819 = vmatpush1.bf16.msra.mxu0 0
    %820 = vmatprep.subr.bf16.mxu0 0
    %821 = vmatpush1.bf16.msra.mxu0 0
    %822 = vmatprep.subr.bf16.mxu0 0
    %823 = vmatpush1.bf16.msra.mxu0 0
    %824 = vmatprep.subr.bf16.mxu0 %v793
    %825 = vmatpush1.bf16.msra.mxu0 %v792
    %826 = vmatprep.subr.bf16.mxu0 0
    %827 = vmatpush2.bf16.msra.mxu0 0
    %828 = vmatprep.subr.bf16.mxu0 0
    %829 = vmatpush2.bf16.msra.mxu0 0
    %830 = vmatprep.subr.bf16.mxu0 0
    %831 = vmatpush2.bf16.msra.mxu0 0
    %832 = vmatprep.subr.bf16.mxu0 0
    %833 = vmatpush2.bf16.msra.mxu0 0
    %834 = vmatprep.subr.bf16.mxu0 0
    %835 = vmatpush2.bf16.msra.mxu0 0
    %836 = vmatprep.subr.bf16.mxu0 0
    %837 = vmatpush2.bf16.msra.mxu0 0
    %838 = vmatprep.subr.bf16.mxu0 0
    %839 = vmatpush2.bf16.msra.mxu0 0
    %840 = vmatprep.subr.bf16.mxu0 0
    %841 = vmatpush2.bf16.msra.mxu0 0
    %842 = vmatprep.mubr.bf16.mxu0 0
    %843 = vmatmul.mubr.bf16.gmra.mxu0 %v805
    %v844 = vpop.f32.mrf.mxu0
    %v845 = vadd.f32 0.0, %v844
    %v846 = vpop.f32.mrf.mxu0
    %v847 = vadd.f32 0.0, %v846
    %v848 = vpop.f32.mrf.mxu0
    %v849 = vadd.f32 0.0, %v848
    %v850 = vpop.f32.mrf.mxu0
    %v851 = vadd.f32 0.0, %v850
    %852 = vmatprep.mubr.bf16.mxu0 0
    %853 = vmatmul.mubr.bf16.gmra.mxu0 %v808
    %v854 = vpop.f32.mrf.mxu0
    %v855 = vadd.f32 0.0, %v854
    %v856 = vpop.f32.mrf.mxu0
    %v857 = vadd.f32 0.0, %v856
    %v858 = vpop.f32.mrf.mxu0
    %v859 = vpop.f32.mrf.mxu0
    %860 = vdwg.mxu0
    %861 = vmatprep.subr.bf16.mxu0 0
    %862 = vmatpush1.bf16.msra.mxu0 0
    %863 = vmatprep.subr.bf16.mxu0 0
    %864 = vmatpush1.bf16.msra.mxu0 0
    %865 = vmatprep.subr.bf16.mxu0 0
    %866 = vmatpush1.bf16.msra.mxu0 0
    %867 = vmatprep.subr.bf16.mxu0 0
    %868 = vmatpush1.bf16.msra.mxu0 0
    %869 = vmatprep.subr.bf16.mxu0 0
    %870 = vmatpush1.bf16.msra.mxu0 0
    %871 = vmatprep.subr.bf16.mxu0 0
    %872 = vmatpush1.bf16.msra.mxu0 0
    %873 = vmatprep.subr.bf16.mxu0 0
    %874 = vmatpush1.bf16.msra.mxu0 0
    %875 = vmatprep.subr.bf16.mxu0 %v795
    %876 = vmatpush1.bf16.msra.mxu0 %v794
    %877 = vmatprep.subr.bf16.mxu0 0
    %878 = vmatpush2.bf16.msra.mxu0 0
    %879 = vmatprep.subr.bf16.mxu0 0
    %880 = vmatpush2.bf16.msra.mxu0 0
    %881 = vmatprep.subr.bf16.mxu0 0
    %882 = vmatpush2.bf16.msra.mxu0 0
    %883 = vmatprep.subr.bf16.mxu0 0
    %884 = vmatpush2.bf16.msra.mxu0 0
    %885 = vmatprep.subr.bf16.mxu0 0
    %886 = vmatpush2.bf16.msra.mxu0 0
    %887 = vmatprep.subr.bf16.mxu0 0
    %888 = vmatpush2.bf16.msra.mxu0 0
    %889 = vmatprep.subr.bf16.mxu0 0
    %890 = vmatpush2.bf16.msra.mxu0 0
    %891 = vmatprep.subr.bf16.mxu0 0
    %892 = vmatpush2.bf16.msra.mxu0 0
    %893 = vmatprep.mubr.bf16.mxu0 0
    %894 = vmatmul.mubr.bf16.gmra.mxu0 %v805
    %v895 = vpop.f32.mrf.mxu0
    %v896 = vadd.f32 0.0, %v895
    %v897 = vpop.f32.mrf.mxu0
    %v898 = vadd.f32 0.0, %v897
    %v899 = vpop.f32.mrf.mxu0
    %v900 = vadd.f32 0.0, %v899
    %v901 = vpop.f32.mrf.mxu0
    %v902 = vadd.f32 0.0, %v901
    %903 = vmatprep.mubr.bf16.mxu0 0
    %904 = vmatmul.mubr.bf16.gmra.mxu0 %v808
    %v905 = vpop.f32.mrf.mxu0
    %v906 = vadd.f32 0.0, %v905
    %v907 = vpop.f32.mrf.mxu0
    %v908 = vadd.f32 0.0, %v907
    %v909 = vpop.f32.mrf.mxu0
    %v910 = vpop.f32.mrf.mxu0
    %911 = vdwg.mxu0
    %v915 = vunpack.c.l.b16 %v766
    %v916 = vunpack.c.l.b16 %v767
    %v917 = vunpack.c.l.b16 %v768
    %v918 = vpack.c.b16 %v916, %v915
    %v919 = vpack.c.b16 %v917, %v917
    %v921 = vsel %vm588, %v918, 0
    %v924 = vsel %vm588, %v919, 0
    %926 = vmatprep.subr.bf16.mxu0 0
    %927 = vmatpush1.bf16.msra.mxu0 0
    %928 = vmatprep.subr.bf16.mxu0 0
    %929 = vmatpush1.bf16.msra.mxu0 0
    %930 = vmatprep.subr.bf16.mxu0 0
    %931 = vmatpush1.bf16.msra.mxu0 0
    %932 = vmatprep.subr.bf16.mxu0 0
    %933 = vmatpush1.bf16.msra.mxu0 0
    %934 = vmatprep.subr.bf16.mxu0 0
    %935 = vmatpush1.bf16.msra.mxu0 0
    %936 = vmatprep.subr.bf16.mxu0 0
    %937 = vmatpush1.bf16.msra.mxu0 0
    %938 = vmatprep.subr.bf16.mxu0 0
    %939 = vmatpush1.bf16.msra.mxu0 0
    %940 = vmatprep.subr.bf16.mxu0 %v778
    %941 = vmatpush1.bf16.msra.mxu0 %v777
    %942 = vmatprep.subr.bf16.mxu0 0
    %943 = vmatpush2.bf16.msra.mxu0 0
    %944 = vmatprep.subr.bf16.mxu0 0
    %945 = vmatpush2.bf16.msra.mxu0 0
    %946 = vmatprep.subr.bf16.mxu0 0
    %947 = vmatpush2.bf16.msra.mxu0 0
    %948 = vmatprep.subr.bf16.mxu0 0
    %949 = vmatpush2.bf16.msra.mxu0 0
    %950 = vmatprep.subr.bf16.mxu0 0
    %951 = vmatpush2.bf16.msra.mxu0 0
    %952 = vmatprep.subr.bf16.mxu0 0
    %953 = vmatpush2.bf16.msra.mxu0 0
    %954 = vmatprep.subr.bf16.mxu0 0
    %955 = vmatpush2.bf16.msra.mxu0 0
    %956 = vmatprep.subr.bf16.mxu0 0
    %957 = vmatpush2.bf16.msra.mxu0 0
    %958 = vmatprep.mubr.bf16.mxu0 0
    %959 = vmatmul.mubr.bf16.gmra.mxu0 %v921
    %v960 = vpop.f32.mrf.mxu0
    %v961 = vadd.f32 %v845, %v960
    %v962 = vpop.f32.mrf.mxu0
    %v963 = vadd.f32 %v847, %v962
    %v964 = vpop.f32.mrf.mxu0
    %v965 = vadd.f32 %v849, %v964
    %v966 = vpop.f32.mrf.mxu0
    %v967 = vadd.f32 %v851, %v966
    %968 = vmatprep.mubr.bf16.mxu0 0
    %969 = vmatmul.mubr.bf16.gmra.mxu0 %v924
    %v970 = vpop.f32.mrf.mxu0
    %v971 = vadd.f32 %v855, %v970
    %v972 = vpop.f32.mrf.mxu0
    %v973 = vadd.f32 %v857, %v972
    %v974 = vpop.f32.mrf.mxu0
    %v975 = vpop.f32.mrf.mxu0
    %976 = vdwg.mxu0
    %977 = vmatprep.subr.bf16.mxu0 0
    %978 = vmatpush1.bf16.msra.mxu0 0
    %979 = vmatprep.subr.bf16.mxu0 0
    %980 = vmatpush1.bf16.msra.mxu0 0
    %981 = vmatprep.subr.bf16.mxu0 0
    %982 = vmatpush1.bf16.msra.mxu0 0
    %983 = vmatprep.subr.bf16.mxu0 0
    %984 = vmatpush1.bf16.msra.mxu0 0
    %985 = vmatprep.subr.bf16.mxu0 0
    %986 = vmatpush1.bf16.msra.mxu0 0
    %987 = vmatprep.subr.bf16.mxu0 0
    %988 = vmatpush1.bf16.msra.mxu0 0
    %989 = vmatprep.subr.bf16.mxu0 0
    %990 = vmatpush1.bf16.msra.mxu0 0
    %991 = vmatprep.subr.bf16.mxu0 %v780
    %992 = vmatpush1.bf16.msra.mxu0 %v779
    %993 = vmatprep.subr.bf16.mxu0 0
    %994 = vmatpush2.bf16.msra.mxu0 0
    %995 = vmatprep.subr.bf16.mxu0 0
    %996 = vmatpush2.bf16.msra.mxu0 0
    %997 = vmatprep.subr.bf16.mxu0 0
    %998 = vmatpush2.bf16.msra.mxu0 0
    %999 = vmatprep.subr.bf16.mxu0 0
    %1000 = vmatpush2.bf16.msra.mxu0 0
    %1001 = vmatprep.subr.bf16.mxu0 0
    %1002 = vmatpush2.bf16.msra.mxu0 0
    %1003 = vmatprep.subr.bf16.mxu0 0
    %1004 = vmatpush2.bf16.msra.mxu0 0
    %1005 = vmatprep.subr.bf16.mxu0 0
    %1006 = vmatpush2.bf16.msra.mxu0 0
    %1007 = vmatprep.subr.bf16.mxu0 0
    %1008 = vmatpush2.bf16.msra.mxu0 0
    %1009 = vmatprep.mubr.bf16.mxu0 0
    %1010 = vmatmul.mubr.bf16.gmra.mxu0 %v921
    %v1011 = vpop.f32.mrf.mxu0
    %v1012 = vadd.f32 %v896, %v1011
    %v1013 = vpop.f32.mrf.mxu0
    %v1014 = vadd.f32 %v898, %v1013
    %v1015 = vpop.f32.mrf.mxu0
    %v1016 = vadd.f32 %v900, %v1015
    %v1017 = vpop.f32.mrf.mxu0
    %v1018 = vadd.f32 %v902, %v1017
    %1019 = vmatprep.mubr.bf16.mxu0 0
    %1020 = vmatmul.mubr.bf16.gmra.mxu0 %v924
    %v1021 = vpop.f32.mrf.mxu0
    %v1022 = vadd.f32 %v906, %v1021
    %v1023 = vpop.f32.mrf.mxu0
    %v1024 = vadd.f32 %v908, %v1023
    %v1025 = vpop.f32.mrf.mxu0
    %v1026 = vpop.f32.mrf.mxu0
    %1027 = vdwg.mxu0
    %v1028 = vld [vmem:[%s2 + $0x58] sm:$0xff]
    %v1029 = vld [vmem:[%s2 + $0x60] sm:$0xff]
    %v1030 = vld [vmem:[%s2 + $0x68] sm:$0xff]
    %v1031 = vld [vmem:[%s2 + $0x70] sm:$0xff]
    %v1032 = vld [vmem:[%s2 + $0x78] sm:$0xff]
    %v1033 = vld [vmem:[%s2 + $0x80] sm:$0xff]
    %v1034 = vadd.f32 %v961, %v963
    %v1035 = vadd.f32 %v1034, %v1012
    %v1036 = vadd.f32 %v1035, %v1014
    %1037 = vadd.xlane.f32.xlu0 %v1036
    %v1038 = vpop.xlane.xlu0 %1037
    %v1039 = vadd.f32 %v965, %v967
    %v1040 = vadd.f32 %v1039, %v1016
    %v1041 = vadd.f32 %v1040, %v1018
    %1042 = vadd.xlane.f32.xlu0 %v1041
    %v1043 = vpop.xlane.xlu0 %1042
    %v1044 = vadd.f32 %v971, %v973
    %v1045 = vadd.f32 %v1044, %v1022
    %v1046 = vadd.f32 %v1045, %v1024
    %1047 = vadd.xlane.f32.xlu0 %v1046
    %v1048 = vpop.xlane.xlu0 %1047
    %v1049 = vmul.f32 %v1038, 0.001953125
    %v1050 = vmul.f32 %v1043, 0.001953125
    %v1051 = vmul.f32 %v1048, 0.001953125
    %v1052 = vmul.f32 %v961, %v961
    %v1053 = vmul.f32 %v963, %v963
    %v1054 = vmul.f32 %v1012, %v1012
    %v1055 = vmul.f32 %v1014, %v1014
    %v1056 = vmul.f32 %v965, %v965
    %v1057 = vmul.f32 %v967, %v967
    %v1058 = vmul.f32 %v1016, %v1016
    %v1059 = vmul.f32 %v1018, %v1018
    %v1060 = vmul.f32 %v971, %v971
    %v1061 = vmul.f32 %v973, %v973
    %v1062 = vmul.f32 %v1022, %v1022
    %v1063 = vmul.f32 %v1024, %v1024
    %v1064 = vadd.f32 %v1052, %v1053
    %v1065 = vadd.f32 %v1064, %v1054
    %v1066 = vadd.f32 %v1065, %v1055
    %1067 = vadd.xlane.f32.xlu0 %v1066
    %v1068 = vpop.xlane.xlu0 %1067
    %v1069 = vadd.f32 %v1056, %v1057
    %v1070 = vadd.f32 %v1069, %v1058
    %v1071 = vadd.f32 %v1070, %v1059
    %1072 = vadd.xlane.f32.xlu0 %v1071
    %v1073 = vpop.xlane.xlu0 %1072
    %v1074 = vadd.f32 %v1060, %v1061
    %v1075 = vadd.f32 %v1074, %v1062
    %v1076 = vadd.f32 %v1075, %v1063
    %1077 = vadd.xlane.f32.xlu0 %v1076
    %v1078 = vpop.xlane.xlu0 %1077
    %v1079 = vmul.f32 %v1068, 0.001953125
    %v1080 = vmul.f32 %v1073, 0.001953125
    %v1081 = vmul.f32 %v1078, 0.001953125
    %v1082 = vmul.f32 %v1049, %v1049
    %v1083 = vmul.f32 %v1050, %v1050
    %v1084 = vmul.f32 %v1051, %v1051
    %v1085 = vsub.f32 %v1079, %v1082
    %v1086 = vsub.f32 %v1080, %v1083
    %v1087 = vsub.f32 %v1081, %v1084
    %v1088 = vmax.f32 %v1085, 0.0
    %v1089 = vmax.f32 %v1086, 0.0
    %v1090 = vmax.f32 %v1087, 0.0
    %v1091 = vadd.f32 %v1088, 1e-05
    %v1092 = vadd.f32 %v1089, 1e-05
    %v1093 = vadd.f32 %v1090, 1e-05
    %v1094 = vrsqrt.pop %v1091
    %v1095 = vrsqrt.pop %v1092
    %v1096 = vrsqrt.pop %v1093
    %v1097 = vmul.f32 %v1094, %v1028
    %v1098 = vmul.f32 %v1095, %v1029
    %v1099 = vmul.f32 %v1096, %v1030
    %v1100 = vmul.f32 %v1049, %v1097
    %v1101 = vmul.f32 %v1050, %v1098
    %v1102 = vmul.f32 %v1051, %v1099
    %v1103 = vsub.f32 %v1031, %v1100
    %v1104 = vsub.f32 %v1032, %v1101
    %v1105 = vsub.f32 %v1033, %v1102
    %1107 = vset.pattern.permute.xlu0 0
    %1108 = vperm.xlu0 %1107, %v1097
    %v1109 = vpop.permute.xlu0 %1108
    %1112 = vset.pattern.permute.xlu0 0
    %1113 = vperm.xlu0 %1112, %v1098
    %v1114 = vpop.permute.xlu0 %1113
    %1117 = vset.pattern.permute.xlu0 0
    %1118 = vperm.xlu0 %1117, %v1099
    %v1119 = vpop.permute.xlu0 %1118
    %v1121 = vmul.f32 %v961, %v1109
    %v1122 = vmul.f32 %v963, %v1109
    %v1123 = vmul.f32 %v1012, %v1109
    %v1124 = vmul.f32 %v1014, %v1109
    %v1125 = vmul.f32 %v965, %v1114
    %v1126 = vmul.f32 %v967, %v1114
    %v1127 = vmul.f32 %v1016, %v1114
    %v1128 = vmul.f32 %v1018, %v1114
    %v1129 = vmul.f32 %v971, %v1119
    %v1130 = vmul.f32 %v973, %v1119
    %v1131 = vmul.f32 %v1022, %v1119
    %v1132 = vmul.f32 %v1024, %v1119
    %1134 = vset.pattern.permute.xlu0 0
    %1135 = vperm.xlu0 %1134, %v1103
    %v1136 = vpop.permute.xlu0 %1135
    %1139 = vset.pattern.permute.xlu0 0
    %1140 = vperm.xlu0 %1139, %v1104
    %v1141 = vpop.permute.xlu0 %1140
    %1144 = vset.pattern.permute.xlu0 0
    %1145 = vperm.xlu0 %1144, %v1105
    %v1146 = vpop.permute.xlu0 %1145
    %v1148 = vadd.f32 %v1121, %v1136
    %v1149 = vadd.f32 %v1122, %v1136
    %v1150 = vadd.f32 %v1123, %v1136
    %v1151 = vadd.f32 %v1124, %v1136
    %v1152 = vadd.f32 %v1125, %v1141
    %v1153 = vadd.f32 %v1126, %v1141
    %v1154 = vadd.f32 %v1127, %v1141
    %v1155 = vadd.f32 %v1128, %v1141
    %v1156 = vadd.f32 %v1129, %v1146
    %v1157 = vadd.f32 %v1130, %v1146
    %v1158 = vadd.f32 %v1131, %v1146
    %v1159 = vadd.f32 %v1132, %v1146
    %v1160 = vld [vmem:[%s1 + $0x40] sm:$0xf]
    %v1161 = vld [vmem:[%s1 + $0x44] sm:$0xf]
    %v1162 = vld [vmem:[%s1 + $0x48] sm:$0xf]
    %v1163 = vld [vmem:[%s1 + $0x4c] sm:$0xf]
    %v1164 = vmax.f32 %v244, 0.0
    %v1165 = vmax.f32 %v246, 0.0
    %v1166 = vmax.f32 %v295, 0.0
    %v1167 = vmax.f32 %v297, 0.0
    %v1168 = vmax.f32 %v248, 0.0
    %v1169 = vmax.f32 %v250, 0.0
    %v1170 = vmax.f32 %v299, 0.0
    %v1171 = vmax.f32 %v301, 0.0
    %v1172 = vmax.f32 %v254, 0.0
    %v1173 = vmax.f32 %v256, 0.0
    %v1174 = vmax.f32 %v305, 0.0
    %v1175 = vmax.f32 %v307, 0.0
    %v1176 = vpack.c.bf16 %v1168, %v1164
    %v1177 = vpack.c.bf16 %v1169, %v1165
    %v1178 = vpack.c.bf16 %v1170, %v1166
    %v1179 = vpack.c.bf16 %v1171, %v1167
    %v1180 = vpack.c.bf16 %v1172, %v1172
    %v1181 = vpack.c.bf16 %v1173, %v1173
    %v1182 = vpack.c.bf16 %v1174, %v1174
    %v1183 = vpack.c.bf16 %v1175, %v1175
    %v1184 = vld [vmem:[%s1 + $0x50] sm:$0xf]
    %v1185 = vld [vmem:[%s1 + $0x54] sm:$0xf]
    %v1186 = vld [vmem:[%s1 + $0x58] sm:$0xf]
    %v1187 = vld [vmem:[%s1 + $0x5c] sm:$0xf]
    %v1188 = vmax.f32 %v1148, 0.0
    %v1189 = vmax.f32 %v1149, 0.0
    %v1190 = vmax.f32 %v1150, 0.0
    %v1191 = vmax.f32 %v1151, 0.0
    %v1192 = vmax.f32 %v1152, 0.0
    %v1193 = vmax.f32 %v1153, 0.0
    %v1194 = vmax.f32 %v1154, 0.0
    %v1195 = vmax.f32 %v1155, 0.0
    %v1196 = vmax.f32 %v1156, 0.0
    %v1197 = vmax.f32 %v1157, 0.0
    %v1198 = vmax.f32 %v1158, 0.0
    %v1199 = vmax.f32 %v1159, 0.0
    %v1200 = vpack.c.bf16 %v1192, %v1188
    %v1201 = vpack.c.bf16 %v1193, %v1189
    %v1202 = vpack.c.bf16 %v1194, %v1190
    %v1203 = vpack.c.bf16 %v1195, %v1191
    %v1204 = vpack.c.bf16 %v1196, %v1196
    %v1205 = vpack.c.bf16 %v1197, %v1197
    %v1206 = vpack.c.bf16 %v1198, %v1198
    %v1207 = vpack.c.bf16 %v1199, %v1199
    %v1212 = vunpack.c.l.b16 %v1184
    %v1213 = vunpack.c.l.b16 %v1185
    %v1214 = vunpack.c.l.b16 %v1186
    %v1215 = vunpack.c.l.b16 %v1187
    %v1216 = vpack.c.b16 %v1213, %v1212
    %v1217 = vpack.c.b16 %v1215, %v1214
    %v1219 = vsel %vm362, %v1216, 0
    %v1222 = vsel %vm362, %v1217, 0
    %v1225 = vsel %vm366, %v1204, 0
    %v1228 = vsel %vm366, %v1205, 0
    %v1231 = vsel %vm366, %v1206, 0
    %v1234 = vsel %vm366, %v1207, 0
    %1236 = vmatprep.subr.bf16.mxu0 0
    %1237 = vmatpush1.bf16.msra.mxu0 0
    %1238 = vmatprep.subr.bf16.mxu0 0
    %1239 = vmatpush1.bf16.msra.mxu0 0
    %1240 = vmatprep.subr.bf16.mxu0 0
    %1241 = vmatpush1.bf16.msra.mxu0 0
    %1242 = vmatprep.subr.bf16.mxu0 0
    %1243 = vmatpush1.bf16.msra.mxu0 0
    %1244 = vmatprep.subr.bf16.mxu0 0
    %1245 = vmatpush1.bf16.msra.mxu0 0
    %1246 = vmatprep.subr.bf16.mxu0 0
    %1247 = vmatpush1.bf16.msra.mxu0 0
    %1248 = vmatprep.subr.bf16.mxu0 %v1228
    %1249 = vmatpush1.bf16.msra.mxu0 %v1225
    %1250 = vmatprep.subr.bf16.mxu0 %v1201
    %1251 = vmatpush1.bf16.msra.mxu0 %v1200
    %1252 = vmatprep.subr.bf16.mxu0 0
    %1253 = vmatpush2.bf16.msra.mxu0 0
    %1254 = vmatprep.subr.bf16.mxu0 0
    %1255 = vmatpush2.bf16.msra.mxu0 0
    %1256 = vmatprep.subr.bf16.mxu0 0
    %1257 = vmatpush2.bf16.msra.mxu0 0
    %1258 = vmatprep.subr.bf16.mxu0 0
    %1259 = vmatpush2.bf16.msra.mxu0 0
    %1260 = vmatprep.subr.bf16.mxu0 0
    %1261 = vmatpush2.bf16.msra.mxu0 0
    %1262 = vmatprep.subr.bf16.mxu0 0
    %1263 = vmatpush2.bf16.msra.mxu0 0
    %1264 = vmatprep.subr.bf16.mxu0 0
    %1265 = vmatpush2.bf16.msra.mxu0 0
    %1266 = vmatprep.subr.bf16.mxu0 0
    %1267 = vmatpush2.bf16.msra.mxu0 0
    %1268 = vmatprep.mubr.bf16.mxu0 0
    %1269 = vmatmul.mubr.bf16.gmra.mxu0 %v1219
    %v1270 = vpop.f32.mrf.mxu0
    %v1271 = vadd.f32 0.0, %v1270
    %v1272 = vpop.f32.mrf.mxu0
    %v1273 = vadd.f32 0.0, %v1272
    %v1274 = vpop.f32.mrf.mxu0
    %v1275 = vadd.f32 0.0, %v1274
    %v1276 = vpop.f32.mrf.mxu0
    %v1277 = vadd.f32 0.0, %v1276
    %1278 = vmatprep.mubr.bf16.mxu0 0
    %1279 = vmatmul.mubr.bf16.gmra.mxu0 %v1222
    %v1280 = vpop.f32.mrf.mxu0
    %v1281 = vadd.f32 0.0, %v1280
    %v1282 = vpop.f32.mrf.mxu0
    %v1283 = vadd.f32 0.0, %v1282
    %v1284 = vpop.f32.mrf.mxu0
    %v1285 = vadd.f32 0.0, %v1284
    %v1286 = vpop.f32.mrf.mxu0
    %v1287 = vadd.f32 0.0, %v1286
    %1288 = vdwg.mxu0
    %1289 = vmatprep.subr.bf16.mxu0 0
    %1290 = vmatpush1.bf16.msra.mxu0 0
    %1291 = vmatprep.subr.bf16.mxu0 0
    %1292 = vmatpush1.bf16.msra.mxu0 0
    %1293 = vmatprep.subr.bf16.mxu0 0
    %1294 = vmatpush1.bf16.msra.mxu0 0
    %1295 = vmatprep.subr.bf16.mxu0 0
    %1296 = vmatpush1.bf16.msra.mxu0 0
    %1297 = vmatprep.subr.bf16.mxu0 0
    %1298 = vmatpush1.bf16.msra.mxu0 0
    %1299 = vmatprep.subr.bf16.mxu0 0
    %1300 = vmatpush1.bf16.msra.mxu0 0
    %1301 = vmatprep.subr.bf16.mxu0 %v1234
    %1302 = vmatpush1.bf16.msra.mxu0 %v1231
    %1303 = vmatprep.subr.bf16.mxu0 %v1203
    %1304 = vmatpush1.bf16.msra.mxu0 %v1202
    %1305 = vmatprep.subr.bf16.mxu0 0
    %1306 = vmatpush2.bf16.msra.mxu0 0
    %1307 = vmatprep.subr.bf16.mxu0 0
    %1308 = vmatpush2.bf16.msra.mxu0 0
    %1309 = vmatprep.subr.bf16.mxu0 0
    %1310 = vmatpush2.bf16.msra.mxu0 0
    %1311 = vmatprep.subr.bf16.mxu0 0
    %1312 = vmatpush2.bf16.msra.mxu0 0
    %1313 = vmatprep.subr.bf16.mxu0 0
    %1314 = vmatpush2.bf16.msra.mxu0 0
    %1315 = vmatprep.subr.bf16.mxu0 0
    %1316 = vmatpush2.bf16.msra.mxu0 0
    %1317 = vmatprep.subr.bf16.mxu0 0
    %1318 = vmatpush2.bf16.msra.mxu0 0
    %1319 = vmatprep.subr.bf16.mxu0 0
    %1320 = vmatpush2.bf16.msra.mxu0 0
    %1321 = vmatprep.mubr.bf16.mxu0 0
    %1322 = vmatmul.mubr.bf16.gmra.mxu0 %v1219
    %v1323 = vpop.f32.mrf.mxu0
    %v1324 = vadd.f32 0.0, %v1323
    %v1325 = vpop.f32.mrf.mxu0
    %v1326 = vadd.f32 0.0, %v1325
    %v1327 = vpop.f32.mrf.mxu0
    %v1328 = vadd.f32 0.0, %v1327
    %v1329 = vpop.f32.mrf.mxu0
    %v1330 = vadd.f32 0.0, %v1329
    %1331 = vmatprep.mubr.bf16.mxu0 0
    %1332 = vmatmul.mubr.bf16.gmra.mxu0 %v1222
    %v1333 = vpop.f32.mrf.mxu0
    %v1334 = vadd.f32 0.0, %v1333
    %v1335 = vpop.f32.mrf.mxu0
    %v1336 = vadd.f32 0.0, %v1335
    %v1337 = vpop.f32.mrf.mxu0
    %v1338 = vadd.f32 0.0, %v1337
    %v1339 = vpop.f32.mrf.mxu0
    %v1340 = vadd.f32 0.0, %v1339
    %1341 = vdwg.mxu0
    %v1346 = vunpack.c.l.b16 %v1160
    %v1347 = vunpack.c.l.b16 %v1161
    %v1348 = vunpack.c.l.b16 %v1162
    %v1349 = vunpack.c.l.b16 %v1163
    %v1350 = vpack.c.b16 %v1347, %v1346
    %v1351 = vpack.c.b16 %v1349, %v1348
    %v1353 = vsel %vm362, %v1350, 0
    %v1356 = vsel %vm362, %v1351, 0
    %v1359 = vsel %vm366, %v1180, 0
    %v1362 = vsel %vm366, %v1181, 0
    %v1365 = vsel %vm366, %v1182, 0
    %v1368 = vsel %vm366, %v1183, 0
    %1370 = vmatprep.subr.bf16.mxu0 0
    %1371 = vmatpush1.bf16.msra.mxu0 0
    %1372 = vmatprep.subr.bf16.mxu0 0
    %1373 = vmatpush1.bf16.msra.mxu0 0
    %1374 = vmatprep.subr.bf16.mxu0 0
    %1375 = vmatpush1.bf16.msra.mxu0 0
    %1376 = vmatprep.subr.bf16.mxu0 0
    %1377 = vmatpush1.bf16.msra.mxu0 0
    %1378 = vmatprep.subr.bf16.mxu0 0
    %1379 = vmatpush1.bf16.msra.mxu0 0
    %1380 = vmatprep.subr.bf16.mxu0 0
    %1381 = vmatpush1.bf16.msra.mxu0 0
    %1382 = vmatprep.subr.bf16.mxu0 %v1362
    %1383 = vmatpush1.bf16.msra.mxu0 %v1359
    %1384 = vmatprep.subr.bf16.mxu0 %v1177
    %1385 = vmatpush1.bf16.msra.mxu0 %v1176
    %1386 = vmatprep.subr.bf16.mxu0 0
    %1387 = vmatpush2.bf16.msra.mxu0 0
    %1388 = vmatprep.subr.bf16.mxu0 0
    %1389 = vmatpush2.bf16.msra.mxu0 0
    %1390 = vmatprep.subr.bf16.mxu0 0
    %1391 = vmatpush2.bf16.msra.mxu0 0
    %1392 = vmatprep.subr.bf16.mxu0 0
    %1393 = vmatpush2.bf16.msra.mxu0 0
    %1394 = vmatprep.subr.bf16.mxu0 0
    %1395 = vmatpush2.bf16.msra.mxu0 0
    %1396 = vmatprep.subr.bf16.mxu0 0
    %1397 = vmatpush2.bf16.msra.mxu0 0
    %1398 = vmatprep.subr.bf16.mxu0 0
    %1399 = vmatpush2.bf16.msra.mxu0 0
    %1400 = vmatprep.subr.bf16.mxu0 0
    %1401 = vmatpush2.bf16.msra.mxu0 0
    %1402 = vmatprep.mubr.bf16.mxu0 0
    %1403 = vmatmul.mubr.bf16.gmra.mxu0 %v1353
    %v1404 = vpop.f32.mrf.mxu0
    %v1405 = vadd.f32 %v1271, %v1404
    %v1406 = vpop.f32.mrf.mxu0
    %v1407 = vadd.f32 %v1273, %v1406
    %v1408 = vpop.f32.mrf.mxu0
    %v1409 = vadd.f32 %v1275, %v1408
    %v1410 = vpop.f32.mrf.mxu0
    %v1411 = vadd.f32 %v1277, %v1410
    %1412 = vmatprep.mubr.bf16.mxu0 0
    %1413 = vmatmul.mubr.bf16.gmra.mxu0 %v1356
    %v1414 = vpop.f32.mrf.mxu0
    %v1415 = vadd.f32 %v1281, %v1414
    %v1416 = vpop.f32.mrf.mxu0
    %v1417 = vadd.f32 %v1283, %v1416
    %v1418 = vpop.f32.mrf.mxu0
    %v1419 = vadd.f32 %v1285, %v1418
    %v1420 = vpop.f32.mrf.mxu0
    %v1421 = vadd.f32 %v1287, %v1420
    %1422 = vdwg.mxu0
    %1423 = vmatprep.subr.bf16.mxu0 0
    %1424 = vmatpush1.bf16.msra.mxu0 0
    %1425 = vmatprep.subr.bf16.mxu0 0
    %1426 = vmatpush1.bf16.msra.mxu0 0
    %1427 = vmatprep.subr.bf16.mxu0 0
    %1428 = vmatpush1.bf16.msra.mxu0 0
    %1429 = vmatprep.subr.bf16.mxu0 0
    %1430 = vmatpush1.bf16.msra.mxu0 0
    %1431 = vmatprep.subr.bf16.mxu0 0
    %1432 = vmatpush1.bf16.msra.mxu0 0
    %1433 = vmatprep.subr.bf16.mxu0 0
    %1434 = vmatpush1.bf16.msra.mxu0 0
    %1435 = vmatprep.subr.bf16.mxu0 %v1368
    %1436 = vmatpush1.bf16.msra.mxu0 %v1365
    %1437 = vmatprep.subr.bf16.mxu0 %v1179
    %1438 = vmatpush1.bf16.msra.mxu0 %v1178
    %1439 = vmatprep.subr.bf16.mxu0 0
    %1440 = vmatpush2.bf16.msra.mxu0 0
    %1441 = vmatprep.subr.bf16.mxu0 0
    %1442 = vmatpush2.bf16.msra.mxu0 0
    %1443 = vmatprep.subr.bf16.mxu0 0
    %1444 = vmatpush2.bf16.msra.mxu0 0
    %1445 = vmatprep.subr.bf16.mxu0 0
    %1446 = vmatpush2.bf16.msra.mxu0 0
    %1447 = vmatprep.subr.bf16.mxu0 0
    %1448 = vmatpush2.bf16.msra.mxu0 0
    %1449 = vmatprep.subr.bf16.mxu0 0
    %1450 = vmatpush2.bf16.msra.mxu0 0
    %1451 = vmatprep.subr.bf16.mxu0 0
    %1452 = vmatpush2.bf16.msra.mxu0 0
    %1453 = vmatprep.subr.bf16.mxu0 0
    %1454 = vmatpush2.bf16.msra.mxu0 0
    %1455 = vmatprep.mubr.bf16.mxu0 0
    %1456 = vmatmul.mubr.bf16.gmra.mxu0 %v1353
    %v1457 = vpop.f32.mrf.mxu0
    %v1458 = vadd.f32 %v1324, %v1457
    %v1459 = vpop.f32.mrf.mxu0
    %v1460 = vadd.f32 %v1326, %v1459
    %v1461 = vpop.f32.mrf.mxu0
    %v1462 = vadd.f32 %v1328, %v1461
    %v1463 = vpop.f32.mrf.mxu0
    %v1464 = vadd.f32 %v1330, %v1463
    %1465 = vmatprep.mubr.bf16.mxu0 0
    %1466 = vmatmul.mubr.bf16.gmra.mxu0 %v1356
    %v1467 = vpop.f32.mrf.mxu0
    %v1468 = vadd.f32 %v1334, %v1467
    %v1469 = vpop.f32.mrf.mxu0
    %v1470 = vadd.f32 %v1336, %v1469
    %v1471 = vpop.f32.mrf.mxu0
    %v1472 = vadd.f32 %v1338, %v1471
    %v1473 = vpop.f32.mrf.mxu0
    %v1474 = vadd.f32 %v1340, %v1473
    %1475 = vdwg.mxu0
    %v1476 = vld [vmem:[%s2 + $0x88] sm:$0xff]
    %v1477 = vld [vmem:[%s2 + $0x90] sm:$0xff]
    %v1478 = vld [vmem:[%s2 + $0x98] sm:$0xff]
    %v1479 = vld [vmem:[%s2 + $0xa0] sm:$0xff]
    %1481 = vset.pattern.permute.xlu0 0
    %1482 = vperm.xlu0 %1481, %v1476
    %v1483 = vpop.permute.xlu0 %1482
    %1486 = vset.pattern.permute.xlu0 0
    %1487 = vperm.xlu0 %1486, %v1477
    %v1488 = vpop.permute.xlu0 %1487
    %1491 = vset.pattern.permute.xlu0 0
    %1492 = vperm.xlu0 %1491, %v1478
    %v1493 = vpop.permute.xlu0 %1492
    %1496 = vset.pattern.permute.xlu0 0
    %1497 = vperm.xlu0 %1496, %v1479
    %v1498 = vpop.permute.xlu0 %1497
    %v1500 = vadd.f32 %v1405, %v1483
    %v1501 = vadd.f32 %v1407, %v1483
    %v1502 = vadd.f32 %v1458, %v1483
    %v1503 = vadd.f32 %v1460, %v1483
    %v1504 = vadd.f32 %v1409, %v1488
    %v1505 = vadd.f32 %v1411, %v1488
    %v1506 = vadd.f32 %v1462, %v1488
    %v1507 = vadd.f32 %v1464, %v1488
    %v1508 = vadd.f32 %v1415, %v1493
    %v1509 = vadd.f32 %v1417, %v1493
    %v1510 = vadd.f32 %v1468, %v1493
    %v1511 = vadd.f32 %v1470, %v1493
    %v1512 = vadd.f32 %v1419, %v1498
    %v1513 = vadd.f32 %v1421, %v1498
    %v1514 = vadd.f32 %v1472, %v1498
    %v1515 = vadd.f32 %v1474, %v1498
    %1516 = vst [vmem:[#allocation4] sm:$0xff] %v1500
    %1517 = vst [vmem:[#allocation4 + $0x8] sm:$0xff] %v1501
    %1518 = vst [vmem:[#allocation4 + $0x10] sm:$0xff] %v1504
    %1519 = vst [vmem:[#allocation4 + $0x18] sm:$0xff] %v1505
    %1520 = vst [vmem:[#allocation4 + $0x20] sm:$0xff] %v1508
    %1521 = vst [vmem:[#allocation4 + $0x28] sm:$0xff] %v1509
    %1522 = vst [vmem:[#allocation4 + $0x30] sm:$0xff] %v1512
    %1523 = vst [vmem:[#allocation4 + $0x38] sm:$0xff] %v1513
    %s1524 = scalar_lea.vmem [#allocation4], 64
    %1525 = vst [vmem:[%s1524] sm:$0xff] %v1502
    %1526 = vst [vmem:[%s1524 + $0x8] sm:$0xff] %v1503
    %1527 = vst [vmem:[%s1524 + $0x10] sm:$0xff] %v1506
    %1528 = vst [vmem:[%s1524 + $0x18] sm:$0xff] %v1507
    %1529 = vst [vmem:[%s1524 + $0x20] sm:$0xff] %v1510
    %1530 = vst [vmem:[%s1524 + $0x28] sm:$0xff] %v1511
    %1531 = vst [vmem:[%s1524 + $0x30] sm:$0xff] %v1514
    %1532 = vst [vmem:[%s1524 + $0x38] sm:$0xff] %v1515
    // Predicated region
    $region78: #{tpu_custom_call.1} parent=1 // pred_check
      _
    $region79: #{tpu_custom_call.1} parent=1 // pred_check_branch
      %1534 = sbr.rel (0) target = $region81
    $region80: #{tpu_custom_call.1} parent=1 // pred_region
      %s1536 = ssub.s32 2048, 2048
      %1537 = vsyncadd [#allocation5], %s1536
      %s1538 = sshll.u32 [#allocation4], 4
      %s1539 = int_to_ptr.vmem [resolvable:$true] %s1538
      %1544 = dma.vmem_to_hbm [thread:$0]  %s1539, 2048, %s3, [#allocation5], 256, 256, 16
    $region81: #{tpu_custom_call.1} parent=1 // pred_fallthru
      _
    // Predicated region
    $region82: #{tpu_custom_call.1} parent=1 // pred_check
      _
    $region83: #{tpu_custom_call.1} parent=1 // pred_check_branch
      %1546 = sbr.rel (0) target = $region85
    $region84: #{tpu_custom_call.1} parent=1 // pred_region
      %1547 = dma.done [#allocation5], 2048
    $region85: #{tpu_custom_call.1} parent=1 // pred_fallthru
      _
    %1548 = vsyncpa [#allocation5], 1
  %1549 = vsyncmov [#allocation3]
  %s1550 = vpop.sfrf %1549
  %p1551 = scmp.eq.s32.totalorder %s1550, 0
  %p1552 = pneg %p1551
  %1554 = shalt.err (%p1552)
  %s1555 = scalar_lea.sflag [#allocation3], 1
  %1556 = vsyncmov %s1555
  %s1557 = vpop.sfrf %1556
  %p1558 = scmp.eq.s32.totalorder %s1557, 0
  %p1559 = pneg %p1558
  %1561 = shalt.err (%p1559)

</llo_original>
